<compile_context>
chip_gen: v6e
topology: v6e:2x2x1
jax: 0.10.0
libtpu: 0.0.40
codegen_flags: <defaults>
</compile_context>

<pallas_src>
import jax
import jax.numpy as jnp
from jax.experimental import pallas as pl
from jax.experimental.pallas import tpu as pltpu


# ---------------------------------------------------------------------------
# Kernel 1: attention + trans_conv + per-batch BatchNorm partial statistics.
# grid = (B, N // TQ); batch axis parallel, query-tile axis arbitrary.
# ---------------------------------------------------------------------------
def _sa_attn_kernel(x_ref, xt_ref, qkw_ref, vw_ref, vb_ref, tw_ref, tb_ref,
                    t_ref, s1_ref, s2_ref,
                    xq_s, acc_s, colsum_s):
    qi = pl.program_id(1)
    last = pl.num_programs(1) - 1

    # Per-batch init: full q/k projection (the "keys") + reset accumulators.
    @pl.when(qi == 0)
    def _():
        xb = x_ref[0].astype(jnp.bfloat16)                          # (C, N)
        xq_s[...] = jnp.dot(
            qkw_ref[...], xb,
            preferred_element_type=jnp.float32).astype(jnp.bfloat16)  # (C4, N)
        acc_s[...] = jnp.zeros_like(acc_s)
        colsum_s[...] = jnp.zeros_like(colsum_s)

    # Projections for this query tile (bf16 MXU operands, f32 accumulation).
    xt = xt_ref[0].astype(jnp.bfloat16)                             # (C, TQ)
    q_tile = jnp.dot(qkw_ref[...], xt,
                     preferred_element_type=jnp.float32)            # (C4, TQ)
    v_tile = jnp.dot(vw_ref[...], xt,
                     preferred_element_type=jnp.float32) + vb_ref[...]  # (C, TQ)

    # energy[n, m] = sum_o q[o, n] * k[o, m]   (q/k weights are tied).
    energy = jax.lax.dot_general(
        q_tile.astype(jnp.bfloat16), xq_s[...],
        (((0,), (0,)), ((), ())),
        preferred_element_type=jnp.float32)                         # (TQ, N)

    # Row softmax over keys — f32 throughout, EUP reciprocal for the divide.
    m = jnp.max(energy, axis=-1, keepdims=True)
    p = jnp.exp(energy - m)
    attn = p * pl.reciprocal(jnp.sum(p, axis=-1, keepdims=True), approx=True)

    # Accumulate column sums (for the dim=1 renorm) and the raw aggregate.
    colsum_s[...] += jnp.sum(attn, axis=0, keepdims=True)           # (1, N)
    acc_s[...] += jnp.dot(v_tile.astype(jnp.bfloat16),
                          attn.astype(jnp.bfloat16),
                          preferred_element_type=jnp.float32)       # (C, N)

    # Per-batch finalize: renorm, trans_conv, partial BN stats.
    @pl.when(qi == last)
    def _():
        x_r = acc_s[...] * pl.reciprocal(1e-9 + colsum_s[...], approx=True)
        d = (x_ref[0] - x_r).astype(jnp.bfloat16)                   # (C, N)
        t = jnp.dot(tw_ref[...], d,
                    preferred_element_type=jnp.float32) + tb_ref[...]
        t_ref[0] = t                                                # (C, N)
        s1_ref[0] = jnp.sum(t, axis=1, keepdims=True)               # (C, 1)
        s2_ref[0] = jnp.sum(t * t, axis=1, keepdims=True)           # (C, 1)


# ---------------------------------------------------------------------------
# Kernel 2: BatchNorm (folded scale/shift) + ReLU + residual.
# ---------------------------------------------------------------------------
def _sa_bn_relu_res_kernel(x_ref, t_ref, scale_ref, shift_ref, o_ref):
    y = scale_ref[...] * t_ref[0] + shift_ref[...]
    o_ref[0] = x_ref[0] + jnp.maximum(y, 0.0)


def prepare_sa_params(qk_w, v_w, v_b, t_w, t_b, gamma, beta):
    """One-time weight prep (outside jit): bf16 MXU weights, (C,1) f32 biases."""
    C = v_w.shape[0]
    return (qk_w.astype(jnp.bfloat16),
            v_w.astype(jnp.bfloat16),
            v_b.reshape(C, 1).astype(jnp.float32),
            t_w.astype(jnp.bfloat16),
            t_b.reshape(C, 1).astype(jnp.float32),
            gamma.astype(jnp.float32),
            beta.astype(jnp.float32))


def sa_layer(x, qk_w, v_w, v_b, t_w, t_b, gamma, beta, *, tq=128, tn=512):
    """SA_Layer forward.  x: (B, C, N) float32 (PyTorch NCW layout)."""
    B, C, N = x.shape
    C4 = qk_w.shape[0]
    x = x.astype(jnp.float32)

    tq = min(tq, N)
    if N % tq:
        tq = N
    tn = min(tn, N)
    if N % tn:
        tn = N

    flops = 2 * B * (N * N * (C + C4) + C * N * (2 * C4 + 2 * C))
    bytes_accessed = 4 * B * C * N * 3 + 2 * (C4 * C + 2 * C * C) + 16 * C

    t, s1, s2 = pl.pallas_call(
        _sa_attn_kernel,
        out_shape=(jax.ShapeDtypeStruct((B, C, N), jnp.float32),
                   jax.ShapeDtypeStruct((B, C, 1), jnp.float32),
                   jax.ShapeDtypeStruct((B, C, 1), jnp.float32)),
        grid_spec=pltpu.PrefetchScalarGridSpec(
            num_scalar_prefetch=0,
            grid=(B, N // tq),
            in_specs=[
                pl.BlockSpec((1, C, N), lambda b, q: (b, 0, 0)),    # x (full, resident per batch)
                pl.BlockSpec((1, C, tq), lambda b, q: (b, 0, q)),   # x (query tile)
                pl.BlockSpec((C4, C), lambda b, q: (0, 0)),         # qk weight (tied q/k)
                pl.BlockSpec((C, C), lambda b, q: (0, 0)),          # v weight
                pl.BlockSpec((C, 1), lambda b, q: (0, 0)),          # v bias
                pl.BlockSpec((C, C), lambda b, q: (0, 0)),          # trans weight
                pl.BlockSpec((C, 1), lambda b, q: (0, 0)),          # trans bias
            ],
            out_specs=(
                pl.BlockSpec((1, C, N), lambda b, q: (b, 0, 0)),    # t = trans_conv(x - x_r)
                pl.BlockSpec((1, C, 1), lambda b, q: (b, 0, 0)),    # per-batch sum
                pl.BlockSpec((1, C, 1), lambda b, q: (b, 0, 0)),    # per-batch sum of squares
            ),
            scratch_shapes=[
                pltpu.VMEM((C4, N), jnp.bfloat16),   # xq (keys), resident per batch
                pltpu.VMEM((C, N), jnp.float32),     # raw aggregate  x_v @ attn
                pltpu.VMEM((1, N), jnp.float32),     # attention column sums
            ]),
        compiler_params=pltpu.CompilerParams(
            dimension_semantics=("parallel", "arbitrary"),
            vmem_limit_bytes=64 * 1024 * 1024),
        cost_estimate=pl.CostEstimate(flops=flops,
                                      transcendentals=B * N * N,
                                      bytes_accessed=bytes_accessed),
    )(x, x, qk_w, v_w, v_b, t_w, t_b)

    # Tiny global combine for BatchNorm statistics (training mode, biased var).
    cnt = jnp.float32(B * N)
    mean = jnp.sum(s1, axis=0)[:, 0] / cnt                          # (C,)
    ex2 = jnp.sum(s2, axis=0)[:, 0] / cnt
    var = jnp.maximum(ex2 - mean * mean, 0.0)
    inv = jax.lax.rsqrt(var + 1e-5)
    scale = (gamma * inv).reshape(C, 1).astype(jnp.float32)
    shift = (beta - mean * gamma * inv).reshape(C, 1).astype(jnp.float32)

    out = pl.pallas_call(
        _sa_bn_relu_res_kernel,
        out_shape=jax.ShapeDtypeStruct((B, C, N), jnp.float32),
        grid_spec=pltpu.PrefetchScalarGridSpec(
            num_scalar_prefetch=0,
            grid=(B, N // tn),
            in_specs=[
                pl.BlockSpec((1, C, tn), lambda b, j: (b, 0, j)),
                pl.BlockSpec((1, C, tn), lambda b, j: (b, 0, j)),
                pl.BlockSpec((C, 1), lambda b, j: (0, 0)),
                pl.BlockSpec((C, 1), lambda b, j: (0, 0)),
            ],
            out_specs=pl.BlockSpec((1, C, tn), lambda b, j: (b, 0, j))),
        compiler_params=pltpu.CompilerParams(
            dimension_semantics=("parallel", "parallel")),
    )(x, t, scale, shift)
    return out


def sa_layer_ref(x, qk_w, v_w, v_b, t_w, t_b, gamma, beta):
    """Pure-JAX f32 reference mirroring the PyTorch forward (NCW layout)."""
    x_q = jnp.einsum('oc,bcn->bno', qk_w, x)
    x_k = jnp.einsum('oc,bcn->bon', qk_w, x)
    x_v = jnp.einsum('oc,bcn->bon', v_w, x) + v_b[None, :, None]
    energy = jnp.einsum('bno,bom->bnm', x_q, x_k)
    attn = jax.nn.softmax(energy, axis=-1)
    attn = attn / (1e-9 + jnp.sum(attn, axis=1, keepdims=True))
    x_r = jnp.einsum('bcn,bnm->bcm', x_v, attn)
    d = x - x_r
    t = jnp.einsum('oc,bcn->bon', t_w, d) + t_b[None, :, None]
    mu = jnp.mean(t, axis=(0, 2), keepdims=True)
    var = jnp.mean((t - mu) ** 2, axis=(0, 2), keepdims=True)
    y = gamma[None, :, None] * (t - mu) * jax.lax.rsqrt(var + 1e-5) \
        + beta[None, :, None]
    return x + jnp.maximum(y, 0.0)


if __name__ == "__main__":
    B, C, N = 2, 64, 256          # channels=64 -> q/k project to 16; 2 query tiles
    C4 = C // 4

    x = jax.random.normal(jax.random.PRNGKey(0), (B, C, N), dtype=jnp.float32)

    ks = jax.random.split(jax.random.PRNGKey(1), 7)
    qk_w = 0.08 * jax.random.normal(ks[0], (C4, C), dtype=jnp.float32)  # tied q/k weight
    v_w = 0.15 * jax.random.normal(ks[1], (C, C), dtype=jnp.float32)
    v_b = 0.10 * jax.random.normal(ks[2], (C,), dtype=jnp.float32)
    t_w = 0.15 * jax.random.normal(ks[3], (C, C), dtype=jnp.float32)
    t_b = 0.10 * jax.random.normal(ks[4], (C,), dtype=jnp.float32)
    gamma = 1.0 + 0.10 * jax.random.normal(ks[5], (C,), dtype=jnp.float32)
    beta = 0.05 * jax.random.normal(ks[6], (C,), dtype=jnp.float32)

    params = prepare_sa_params(qk_w, v_w, v_b, t_w, t_b, gamma, beta)
    fwd = jax.jit(sa_layer)
    out = jax.block_until_ready(fwd(x, *params))

    ref = sa_layer_ref(x, qk_w, v_w, v_b, t_w, t_b, gamma, beta)
    assert out.shape == (B, C, N)
    err_max = float(jnp.max(jnp.abs(out - ref)))
    err_rel = float(jnp.sqrt(jnp.sum((out - ref) ** 2) / jnp.sum(ref ** 2)))
    # bf16 MXU operands (f32 accumulation / f32 softmax & BN) tolerance.
    assert err_rel < 3e-2 and err_max < 0.15, (err_rel, err_max)
    print("KERNEL_OK")
</pallas_src>

<mosaic_0001>
module attributes {stable_mosaic.version = 11 : i64} {
  func.func @_sa_attn_kernel(%arg0: i32, %arg1: i32, %arg2: memref<1x64x256xf32, #tpu.memory_space<vmem>>, %arg3: memref<1x64x128xf32, #tpu.memory_space<vmem>>, %arg4: memref<16x64xbf16, #tpu.memory_space<vmem>>, %arg5: memref<64x64xbf16, #tpu.memory_space<vmem>>, %arg6: memref<64x1xf32, #tpu.memory_space<vmem>>, %arg7: memref<64x64xbf16, #tpu.memory_space<vmem>>, %arg8: memref<64x1xf32, #tpu.memory_space<vmem>>, %arg9: memref<1x64x256xf32, #tpu.memory_space<vmem>>, %arg10: memref<1x64x1xf32, #tpu.memory_space<vmem>>, %arg11: memref<1x64x1xf32, #tpu.memory_space<vmem>>, %arg12: memref<16x256xbf16, #tpu.memory_space<vmem>>, %arg13: memref<64x256xf32, #tpu.memory_space<vmem>>, %arg14: memref<1x256xf32, #tpu.memory_space<vmem>>) attributes {dimension_semantics = [#tpu.dimension_semantics<parallel>, #tpu.dimension_semantics<arbitrary>], iteration_bounds = array<i64: 2, 2>, scalar_prefetch = 0 : i64, scratch_operands = 3 : i64, tpu.core_type = #tpu.core_type<tc>, window_params = [{transform_indices = @transform_0, window_bounds = array<i64: 1, 64, 256>}, {transform_indices = @transform_1, window_bounds = array<i64: 1, 64, 128>}, {pipeline_mode = #tpu.pipeline_mode<synchronous>, transform_indices = @transform_2, window_bounds = array<i64: 16, 64>}, {pipeline_mode = #tpu.pipeline_mode<synchronous>, transform_indices = @transform_3, window_bounds = array<i64: 64, 64>}, {pipeline_mode = #tpu.pipeline_mode<synchronous>, transform_indices = @transform_4, window_bounds = array<i64: 64, 1>}, {pipeline_mode = #tpu.pipeline_mode<synchronous>, transform_indices = @transform_5, window_bounds = array<i64: 64, 64>}, {pipeline_mode = #tpu.pipeline_mode<synchronous>, transform_indices = @transform_6, window_bounds = array<i64: 64, 1>}, {transform_indices = @transform_7, window_bounds = array<i64: 1, 64, 256>}, {transform_indices = @transform_8, window_bounds = array<i64: 1, 64, 1>}, {transform_indices = @transform_9, window_bounds = array<i64: 1, 64, 1>}]} {
    %c0_i32 = arith.constant 0 : i32
    %0 = arith.cmpi eq, %arg1, %c0_i32 : i32
    %1 = arith.extui %0 : i1 to i32
    %c0_i32_0 = arith.constant 0 : i32
    %2 = arith.cmpi ne, %1, %c0_i32_0 : i32
    scf.if %2 {
      %c0_26 = arith.constant 0 : index
      %c0_27 = arith.constant 0 : index
      %c0_28 = arith.constant 0 : index
      %40 = vector.load %arg2[%c0_26, %c0_27, %c0_28] : memref<1x64x256xf32, #tpu.memory_space<vmem>>, vector<1x64x256xf32>
      %41 = vector.shape_cast %40 : vector<1x64x256xf32> to vector<64x256xf32>
      %42 = arith.truncf %41 : vector<64x256xf32> to vector<64x256xbf16>
      %c0_29 = arith.constant 0 : index
      %c0_30 = arith.constant 0 : index
      %43 = vector.load %arg4[%c0_29, %c0_30] : memref<16x64xbf16, #tpu.memory_space<vmem>>, vector<16x64xbf16>
      %cst_31 = arith.constant dense<0.000000e+00> : vector<16x256xf32>
      %44 = tpu.matmul %43, %42, %cst_31 {dimension_numbers = #tpu.dot_dimension_numbers<[1], [0], [0], [1], [0, 0, 1, 1], [], []>} : vector<16x64xbf16>, vector<64x256xbf16>, vector<16x256xf32> -> vector<16x256xf32>
      %45 = arith.truncf %44 : vector<16x256xf32> to vector<16x256xbf16>
      %c0_32 = arith.constant 0 : index
      %c0_33 = arith.constant 0 : index
      %46 = vector.load %arg12[%c0_32, %c0_33] : memref<16x256xbf16, #tpu.memory_space<vmem>>, vector<16x256xbf16>
      tpu.vector_store %arg12[%c0_32, %c0_33], %45 {strides = array<i32>} : memref<16x256xbf16, #tpu.memory_space<vmem>>, vector<16x256xbf16>,
      %cst_34 = arith.constant 0.000000e+00 : f32
      %47 = vector.broadcast %cst_34 : f32 to vector<64x256xf32>
      %c0_35 = arith.constant 0 : index
      %c0_36 = arith.constant 0 : index
      %48 = vector.load %arg13[%c0_35, %c0_36] : memref<64x256xf32, #tpu.memory_space<vmem>>, vector<64x256xf32>
      tpu.vector_store %arg13[%c0_35, %c0_36], %47 {strides = array<i32>} : memref<64x256xf32, #tpu.memory_space<vmem>>, vector<64x256xf32>,
      %cst_37 = arith.constant 0.000000e+00 : f32
      %49 = vector.broadcast %cst_37 : f32 to vector<1x256xf32>
      %c0_38 = arith.constant 0 : index
      %c0_39 = arith.constant 0 : index
      %50 = vector.load %arg14[%c0_38, %c0_39] : memref<1x256xf32, #tpu.memory_space<vmem>>, vector<1x256xf32>
      tpu.vector_store %arg14[%c0_38, %c0_39], %49 {strides = array<i32>} : memref<1x256xf32, #tpu.memory_space<vmem>>, vector<1x256xf32>,
    } else {
    }
    %c0 = arith.constant 0 : index
    %c0_1 = arith.constant 0 : index
    %c0_2 = arith.constant 0 : index
    %3 = vector.load %arg3[%c0, %c0_1, %c0_2] : memref<1x64x128xf32, #tpu.memory_space<vmem>>, vector<1x64x128xf32>
    %4 = vector.shape_cast %3 : vector<1x64x128xf32> to vector<64x128xf32>
    %5 = arith.truncf %4 : vector<64x128xf32> to vector<64x128xbf16>
    %c0_3 = arith.constant 0 : index
    %c0_4 = arith.constant 0 : index
    %6 = vector.load %arg4[%c0_3, %c0_4] : memref<16x64xbf16, #tpu.memory_space<vmem>>, vector<16x64xbf16>
    %cst = arith.constant dense<0.000000e+00> : vector<16x128xf32>
    %7 = tpu.matmul %6, %5, %cst {dimension_numbers = #tpu.dot_dimension_numbers<[1], [0], [0], [1], [0, 0, 1, 1], [], []>} : vector<16x64xbf16>, vector<64x128xbf16>, vector<16x128xf32> -> vector<16x128xf32>
    %c0_5 = arith.constant 0 : index
    %c0_6 = arith.constant 0 : index
    %8 = vector.load %arg5[%c0_5, %c0_6] : memref<64x64xbf16, #tpu.memory_space<vmem>>, vector<64x64xbf16>
    %cst_7 = arith.constant dense<0.000000e+00> : vector<64x128xf32>
    %9 = tpu.matmul %8, %5, %cst_7 {dimension_numbers = #tpu.dot_dimension_numbers<[1], [0], [0], [1], [0, 0, 1, 1], [], []>} : vector<64x64xbf16>, vector<64x128xbf16>, vector<64x128xf32> -> vector<64x128xf32>
    %c0_8 = arith.constant 0 : index
    %c0_9 = arith.constant 0 : index
    %10 = vector.load %arg6[%c0_8, %c0_9] : memref<64x1xf32, #tpu.memory_space<vmem>>, vector<64x1xf32>
    %11 = vector.broadcast %10 : vector<64x1xf32> to vector<64x128xf32>
    %12 = arith.addf %9, %11 : vector<64x128xf32>
    %13 = arith.truncf %7 : vector<16x128xf32> to vector<16x128xbf16>
    %c0_10 = arith.constant 0 : index
    %c0_11 = arith.constant 0 : index
    %14 = vector.load %arg12[%c0_10, %c0_11] : memref<16x256xbf16, #tpu.memory_space<vmem>>, vector<16x256xbf16>
    %cst_12 = arith.constant dense<0.000000e+00> : vector<128x256xf32>
    %15 = tpu.matmul %13, %14, %cst_12 {dimension_numbers = #tpu.dot_dimension_numbers<[0], [0], [1], [1], [0, 1, 1, 1], [], []>} : vector<16x128xbf16>, vector<16x256xbf16>, vector<128x256xf32> -> vector<128x256xf32>
    %cst_13 = arith.constant dense<0xFF800000> : vector<128xf32>
    %16 = vector.multi_reduction <maximumf>, %15, %cst_13 [1] : vector<128x256xf32> to vector<128xf32>
    %17 = vector.shape_cast %16 : vector<128xf32> to vector<128x1xf32>
    %18 = vector.broadcast %17 : vector<128x1xf32> to vector<128x256xf32>
    %19 = arith.subf %15, %18 : vector<128x256xf32>
    %20 = math.exp %19 : vector<128x256xf32>
    %cst_14 = arith.constant dense<0.000000e+00> : vector<128xf32>
    %21 = vector.multi_reduction <add>, %20, %cst_14 [1] : vector<128x256xf32> to vector<128xf32>
    %22 = vector.shape_cast %21 : vector<128xf32> to vector<128x1xf32>
    %23 = tpu.reciprocal %22 {approx = true} : vector<128x1xf32> -> vector<128x1xf32>
    %24 = vector.broadcast %23 : vector<128x1xf32> to vector<128x256xf32>
    %25 = arith.mulf %20, %24 : vector<128x256xf32>
    %c0_15 = arith.constant 0 : index
    %c0_16 = arith.constant 0 : index
    %26 = vector.load %arg14[%c0_15, %c0_16] : memref<1x256xf32, #tpu.memory_space<vmem>>, vector<1x256xf32>
    %cst_17 = arith.constant dense<0.000000e+00> : vector<256xf32>
    %27 = vector.multi_reduction <add>, %25, %cst_17 [0] : vector<128x256xf32> to vector<256xf32>
    %28 = vector.shape_cast %27 : vector<256xf32> to vector<1x256xf32>
    %29 = arith.addf %26, %28 : vector<1x256xf32>
    %c0_18 = arith.constant 0 : index
    %c0_19 = arith.constant 0 : index
    %30 = vector.load %arg14[%c0_18, %c0_19] : memref<1x256xf32, #tpu.memory_space<vmem>>, vector<1x256xf32>
    tpu.vector_store %arg14[%c0_18, %c0_19], %29 {strides = array<i32>} : memref<1x256xf32, #tpu.memory_space<vmem>>, vector<1x256xf32>,
    %c0_20 = arith.constant 0 : index
    %c0_21 = arith.constant 0 : index
    %31 = vector.load %arg13[%c0_20, %c0_21] : memref<64x256xf32, #tpu.memory_space<vmem>>, vector<64x256xf32>
    %32 = arith.truncf %12 : vector<64x128xf32> to vector<64x128xbf16>
    %33 = arith.truncf %25 : vector<128x256xf32> to vector<128x256xbf16>
    %cst_22 = arith.constant dense<0.000000e+00> : vector<64x256xf32>
    %34 = tpu.matmul %32, %33, %cst_22 {dimension_numbers = #tpu.dot_dimension_numbers<[1], [0], [0], [1], [0, 0, 1, 1], [], []>} : vector<64x128xbf16>, vector<128x256xbf16>, vector<64x256xf32> -> vector<64x256xf32>
    %35 = arith.addf %31, %34 : vector<64x256xf32>
    %c0_23 = arith.constant 0 : index
    %c0_24 = arith.constant 0 : index
    %36 = vector.load %arg13[%c0_23, %c0_24] : memref<64x256xf32, #tpu.memory_space<vmem>>, vector<64x256xf32>
    tpu.vector_store %arg13[%c0_23, %c0_24], %35 {strides = array<i32>} : memref<64x256xf32, #tpu.memory_space<vmem>>, vector<64x256xf32>,
    %c1_i32 = arith.constant 1 : i32
    %37 = arith.cmpi eq, %arg1, %c1_i32 : i32
    %38 = arith.extui %37 : i1 to i32
    %c0_i32_25 = arith.constant 0 : i32
    %39 = arith.cmpi ne, %38, %c0_i32_25 : i32
    scf.if %39 {
      %c0_26 = arith.constant 0 : index
      %c0_27 = arith.constant 0 : index
      %40 = vector.load %arg13[%c0_26, %c0_27] : memref<64x256xf32, #tpu.memory_space<vmem>>, vector<64x256xf32>
      %c0_28 = arith.constant 0 : index
      %c0_29 = arith.constant 0 : index
      %41 = vector.load %arg14[%c0_28, %c0_29] : memref<1x256xf32, #tpu.memory_space<vmem>>, vector<1x256xf32>
      %cst_30 = arith.constant 9.99999971E-10 : f32
      %42 = vector.broadcast %cst_30 : f32 to vector<1x256xf32>
      %43 = arith.addf %42, %41 : vector<1x256xf32>
      %44 = tpu.reciprocal %43 {approx = true} : vector<1x256xf32> -> vector<1x256xf32>
      %45 = vector.broadcast %44 : vector<1x256xf32> to vector<64x256xf32>
      %46 = arith.mulf %40, %45 : vector<64x256xf32>
      %c0_31 = arith.constant 0 : index
      %c0_32 = arith.constant 0 : index
      %c0_33 = arith.constant 0 : index
      %47 = vector.load %arg2[%c0_31, %c0_32, %c0_33] : memref<1x64x256xf32, #tpu.memory_space<vmem>>, vector<1x64x256xf32>
      %48 = vector.shape_cast %47 : vector<1x64x256xf32> to vector<64x256xf32>
      %49 = arith.subf %48, %46 : vector<64x256xf32>
      %50 = arith.truncf %49 : vector<64x256xf32> to vector<64x256xbf16>
      %c0_34 = arith.constant 0 : index
      %c0_35 = arith.constant 0 : index
      %51 = vector.load %arg7[%c0_34, %c0_35] : memref<64x64xbf16, #tpu.memory_space<vmem>>, vector<64x64xbf16>
      %cst_36 = arith.constant dense<0.000000e+00> : vector<64x256xf32>
      %52 = tpu.matmul %51, %50, %cst_36 {dimension_numbers = #tpu.dot_dimension_numbers<[1], [0], [0], [1], [0, 0, 1, 1], [], []>} : vector<64x64xbf16>, vector<64x256xbf16>, vector<64x256xf32> -> vector<64x256xf32>
      %c0_37 = arith.constant 0 : index
      %c0_38 = arith.constant 0 : index
      %53 = vector.load %arg8[%c0_37, %c0_38] : memref<64x1xf32, #tpu.memory_space<vmem>>, vector<64x1xf32>
      %54 = vector.broadcast %53 : vector<64x1xf32> to vector<64x256xf32>
      %55 = arith.addf %52, %54 : vector<64x256xf32>
      %c0_39 = arith.constant 0 : index
      %c0_40 = arith.constant 0 : index
      %c0_41 = arith.constant 0 : index
      %56 = vector.load %arg9[%c0_39, %c0_40, %c0_41] : memref<1x64x256xf32, #tpu.memory_space<vmem>>, vector<1x64x256xf32>
      %57 = vector.shape_cast %56 : vector<1x64x256xf32> to vector<64x256xf32>
      %58 = vector.shape_cast %55 : vector<64x256xf32> to vector<1x64x256xf32>
      tpu.vector_store %arg9[%c0_39, %c0_40, %c0_41], %58 {strides = array<i32>} : memref<1x64x256xf32, #tpu.memory_space<vmem>>, vector<1x64x256xf32>,
      %cst_42 = arith.constant dense<0.000000e+00> : vector<64xf32>
      %59 = vector.multi_reduction <add>, %55, %cst_42 [1] : vector<64x256xf32> to vector<64xf32>
      %60 = vector.shape_cast %59 : vector<64xf32> to vector<64x1xf32>
      %c0_43 = arith.constant 0 : index
      %c0_44 = arith.constant 0 : index
      %c0_45 = arith.constant 0 : index
      %61 = vector.load %arg10[%c0_43, %c0_44, %c0_45] : memref<1x64x1xf32, #tpu.memory_space<vmem>>, vector<1x64x1xf32>
      %62 = vector.shape_cast %61 : vector<1x64x1xf32> to vector<64x1xf32>
      %63 = vector.shape_cast %60 : vector<64x1xf32> to vector<1x64x1xf32>
      tpu.vector_store %arg10[%c0_43, %c0_44, %c0_45], %63 {strides = array<i32>} : memref<1x64x1xf32, #tpu.memory_space<vmem>>, vector<1x64x1xf32>,
      %64 = arith.mulf %55, %55 : vector<64x256xf32>
      %cst_46 = arith.constant dense<0.000000e+00> : vector<64xf32>
      %65 = vector.multi_reduction <add>, %64, %cst_46 [1] : vector<64x256xf32> to vector<64xf32>
      %66 = vector.shape_cast %65 : vector<64xf32> to vector<64x1xf32>
      %c0_47 = arith.constant 0 : index
      %c0_48 = arith.constant 0 : index
      %c0_49 = arith.constant 0 : index
      %67 = vector.load %arg11[%c0_47, %c0_48, %c0_49] : memref<1x64x1xf32, #tpu.memory_space<vmem>>, vector<1x64x1xf32>
      %68 = vector.shape_cast %67 : vector<1x64x1xf32> to vector<64x1xf32>
      %69 = vector.shape_cast %66 : vector<64x1xf32> to vector<1x64x1xf32>
      tpu.vector_store %arg11[%c0_47, %c0_48, %c0_49], %69 {strides = array<i32>} : memref<1x64x1xf32, #tpu.memory_space<vmem>>, vector<1x64x1xf32>,
    } else {
    }
    return
  }
  func.func @transform_0(%arg0: i32, %arg1: i32) -> (i32, i32, i32) {
    %c0_i32 = arith.constant 0 : i32
    %c0_i32_0 = arith.constant 0 : i32
    %c0_i32_1 = arith.constant 0 : i32
    return %arg0, %c0_i32, %c0_i32_0 : i32, i32, i32
  }
  func.func @transform_1(%arg0: i32, %arg1: i32) -> (i32, i32, i32) {
    %c0_i32 = arith.constant 0 : i32
    %c0_i32_0 = arith.constant 0 : i32
    return %arg0, %c0_i32, %arg1 : i32, i32, i32
  }
  func.func @transform_2(%arg0: i32, %arg1: i32) -> (i32, i32) {
    %c0_i32 = arith.constant 0 : i32
    %c0_i32_0 = arith.constant 0 : i32
    %c0_i32_1 = arith.constant 0 : i32
    return %c0_i32, %c0_i32_0 : i32, i32
  }
  func.func @transform_3(%arg0: i32, %arg1: i32) -> (i32, i32) {
    %c0_i32 = arith.constant 0 : i32
    %c0_i32_0 = arith.constant 0 : i32
    %c0_i32_1 = arith.constant 0 : i32
    return %c0_i32, %c0_i32_0 : i32, i32
  }
  func.func @transform_4(%arg0: i32, %arg1: i32) -> (i32, i32) {
    %c0_i32 = arith.constant 0 : i32
    %c0_i32_0 = arith.constant 0 : i32
    %c0_i32_1 = arith.constant 0 : i32
    return %c0_i32, %c0_i32_0 : i32, i32
  }
  func.func @transform_5(%arg0: i32, %arg1: i32) -> (i32, i32) {
    %c0_i32 = arith.constant 0 : i32
    %c0_i32_0 = arith.constant 0 : i32
    %c0_i32_1 = arith.constant 0 : i32
    return %c0_i32, %c0_i32_0 : i32, i32
  }
  func.func @transform_6(%arg0: i32, %arg1: i32) -> (i32, i32) {
    %c0_i32 = arith.constant 0 : i32
    %c0_i32_0 = arith.constant 0 : i32
    %c0_i32_1 = arith.constant 0 : i32
    return %c0_i32, %c0_i32_0 : i32, i32
  }
  func.func @transform_7(%arg0: i32, %arg1: i32) -> (i32, i32, i32) {
    %c0_i32 = arith.constant 0 : i32
    %c0_i32_0 = arith.constant 0 : i32
    %c0_i32_1 = arith.constant 0 : i32
    return %arg0, %c0_i32, %c0_i32_0 : i32, i32, i32
  }
  func.func @transform_8(%arg0: i32, %arg1: i32) -> (i32, i32, i32) {
    %c0_i32 = arith.constant 0 : i32
    %c0_i32_0 = arith.constant 0 : i32
    %c0_i32_1 = arith.constant 0 : i32
    return %arg0, %c0_i32, %c0_i32_0 : i32, i32, i32
  }
  func.func @transform_9(%arg0: i32, %arg1: i32) -> (i32, i32, i32) {
    %c0_i32 = arith.constant 0 : i32
    %c0_i32_0 = arith.constant 0 : i32
    %c0_i32_1 = arith.constant 0 : i32
    return %arg0, %c0_i32, %c0_i32_0 : i32, i32, i32
  }
}

module attributes {stable_mosaic.version = 11 : i64} {
  func.func @_sa_bn_relu_res_kernel(%arg0: i32, %arg1: i32, %arg2: memref<1x64x256xf32, #tpu.memory_space<vmem>>, %arg3: memref<1x64x256xf32, #tpu.memory_space<vmem>>, %arg4: memref<64x1xf32, #tpu.memory_space<vmem>>, %arg5: memref<64x1xf32, #tpu.memory_space<vmem>>, %arg6: memref<1x64x256xf32, #tpu.memory_space<vmem>>) attributes {dimension_semantics = [#tpu.dimension_semantics<parallel>, #tpu.dimension_semantics<parallel>], iteration_bounds = array<i64: 2, 1>, scalar_prefetch = 0 : i64, scratch_operands = 0 : i64, tpu.core_type = #tpu.core_type<tc>, window_params = [{transform_indices = @transform_0, window_bounds = array<i64: 1, 64, 256>}, {transform_indices = @transform_1, window_bounds = array<i64: 1, 64, 256>}, {pipeline_mode = #tpu.pipeline_mode<synchronous>, transform_indices = @transform_2, window_bounds = array<i64: 64, 1>}, {pipeline_mode = #tpu.pipeline_mode<synchronous>, transform_indices = @transform_3, window_bounds = array<i64: 64, 1>}, {transform_indices = @transform_4, window_bounds = array<i64: 1, 64, 256>}]} {
    %c0 = arith.constant 0 : index
    %c0_0 = arith.constant 0 : index
    %0 = vector.load %arg4[%c0, %c0_0] : memref<64x1xf32, #tpu.memory_space<vmem>>, vector<64x1xf32>
    %c0_1 = arith.constant 0 : index
    %c0_2 = arith.constant 0 : index
    %c0_3 = arith.constant 0 : index
    %1 = vector.load %arg3[%c0_1, %c0_2, %c0_3] : memref<1x64x256xf32, #tpu.memory_space<vmem>>, vector<1x64x256xf32>
    %2 = vector.shape_cast %1 : vector<1x64x256xf32> to vector<64x256xf32>
    %3 = vector.broadcast %0 : vector<64x1xf32> to vector<64x256xf32>
    %4 = arith.mulf %3, %2 : vector<64x256xf32>
    %c0_4 = arith.constant 0 : index
    %c0_5 = arith.constant 0 : index
    %5 = vector.load %arg5[%c0_4, %c0_5] : memref<64x1xf32, #tpu.memory_space<vmem>>, vector<64x1xf32>
    %6 = vector.broadcast %5 : vector<64x1xf32> to vector<64x256xf32>
    %7 = arith.addf %4, %6 : vector<64x256xf32>
    %c0_6 = arith.constant 0 : index
    %c0_7 = arith.constant 0 : index
    %c0_8 = arith.constant 0 : index
    %8 = vector.load %arg2[%c0_6, %c0_7, %c0_8] : memref<1x64x256xf32, #tpu.memory_space<vmem>>, vector<1x64x256xf32>
    %9 = vector.shape_cast %8 : vector<1x64x256xf32> to vector<64x256xf32>
    %cst = arith.constant 0.000000e+00 : f32
    %10 = vector.broadcast %cst : f32 to vector<64x256xf32>
    %11 = arith.maximumf %7, %10 : vector<64x256xf32>
    %12 = arith.addf %9, %11 : vector<64x256xf32>
    %c0_9 = arith.constant 0 : index
    %c0_10 = arith.constant 0 : index
    %c0_11 = arith.constant 0 : index
    %13 = vector.load %arg6[%c0_9, %c0_10, %c0_11] : memref<1x64x256xf32, #tpu.memory_space<vmem>>, vector<1x64x256xf32>
    %14 = vector.shape_cast %13 : vector<1x64x256xf32> to vector<64x256xf32>
    %15 = vector.shape_cast %12 : vector<64x256xf32> to vector<1x64x256xf32>
    tpu.vector_store %arg6[%c0_9, %c0_10, %c0_11], %15 {strides = array<i32>} : memref<1x64x256xf32, #tpu.memory_space<vmem>>, vector<1x64x256xf32>,
    return
  }
  func.func @transform_0(%arg0: i32, %arg1: i32) -> (i32, i32, i32) {
    %c0_i32 = arith.constant 0 : i32
    %c0_i32_0 = arith.constant 0 : i32
    return %arg0, %c0_i32, %arg1 : i32, i32, i32
  }
  func.func @transform_1(%arg0: i32, %arg1: i32) -> (i32, i32, i32) {
    %c0_i32 = arith.constant 0 : i32
    %c0_i32_0 = arith.constant 0 : i32
    return %arg0, %c0_i32, %arg1 : i32, i32, i32
  }
  func.func @transform_2(%arg0: i32, %arg1: i32) -> (i32, i32) {
    %c0_i32 = arith.constant 0 : i32
    %c0_i32_0 = arith.constant 0 : i32
    %c0_i32_1 = arith.constant 0 : i32
    return %c0_i32, %c0_i32_0 : i32, i32
  }
  func.func @transform_3(%arg0: i32, %arg1: i32) -> (i32, i32) {
    %c0_i32 = arith.constant 0 : i32
    %c0_i32_0 = arith.constant 0 : i32
    %c0_i32_1 = arith.constant 0 : i32
    return %c0_i32, %c0_i32_0 : i32, i32
  }
  func.func @transform_4(%arg0: i32, %arg1: i32) -> (i32, i32, i32) {
    %c0_i32 = arith.constant 0 : i32
    %c0_i32_0 = arith.constant 0 : i32
    return %arg0, %c0_i32, %arg1 : i32, i32, i32
  }
}

</mosaic_0001>

<llo_original>
// kernel: sa_layer.3
$region0: #{sa_layer.3}
  #allocation0 [shape = 'u32[]', space=smem, size = 0x4, offset = 0x4, fixed_abs, tag = 'smem constant byte address 0x4 - core index']
  #allocation1 [shape = 'u32[144,128]{1,0:T(1,128)}', space=vmem, size = 0x12000, scoped, tag = 'internal scratch']
  %s0 = inlined_call_operand.vmem [shape: f32[2,64,256], index: 0, kind: input, shape index: {}]
  %s1 = inlined_call_operand.vmem [shape: f32[2,64,256], index: 1, kind: input, shape index: {}]
  %s2 = inlined_call_operand.vmem [shape: f32[64,1], index: 2, kind: input, shape index: {}]
  %s3 = inlined_call_operand.vmem [shape: f32[64,1], index: 3, kind: input, shape index: {}]
  %s4 = inlined_call_operand.hbm [shape: f32[2,64,256], index: 4, kind: output, shape index: {}]
  %s5 = sld [smem:[#allocation0]]
  $region49: #{sa_layer.3} parent=0
    _
  %s7 = ssub.s32 1, %s5
  %s8 = scalar_select 0, %s7, %s5
  $region1: #{sa_layer.3} parent=0
    #allocation2 [shape = 'u8[131072]{0}', space=vmem, size = 0x20000, scoped, tag = 'output window, operand 0']
    #allocation3 [shape = 's32[2]{0}', space=sflag, size = 0x8, scoped, tag = 'scoped memory for sa_layer.3']
    %9 = vsyncpa [#allocation3], 0
    %s10 = scalar_lea.sflag [#allocation3], 1
    %11 = vsyncpa %s10, 0
    loop: start=0, step=1, limit=4
    $region2: #{sa_layer.3} parent=1 // loop_pre_header
      _
    $region3: #{sa_layer.3} parent=1 // loop_header
      %s13 = sphi 0, %s17
      %p14 = scmp.ge.s32.totalorder %s13, 4
      %s20 = sphi 0, %s32
      %s21 = sphi 0, %s28
      %s22 = sphi 0, %s20
      %s23 = sphi 0, %s21
      %s24 = sphi 0, %s22
      %s25 = sphi 0, %s23
      %s37 = sphi 0, %s39
      %s40 = sphi 0, %s37
      %s41 = sphi 0, %s40
      %s57 = sphi 0, %s41
      %s65 = sphi 0, %s67
      %s68 = sphi 0, %s65
      %s69 = sphi 0, %s68
      %s85 = sphi 0, %s69
      %s89 = sphi 0, %s89
      %s91 = sphi 0, %s89
      %s92 = sphi 0, %s91
      %s106 = sphi 0, %s92
      %s110 = sphi 0, %s110
      %s112 = sphi 0, %s110
      %s113 = sphi 0, %s112
      %s127 = sphi 0, %s113
      %s135 = sphi 0, %s137
      %s138 = sphi 0, %s135
      %s139 = sphi 0, %s138
      %s155 = sphi 0, %s139
    $region4: #{sa_layer.3} parent=1 // loop_header_branch
      %16 = sbr.rel (%p14) target = $region8
    $region5: #{sa_layer.3} parent=1 // loop_body
      %s18 = ssub.s32 %s13, 1
      %s19 = ssub.s32 %s13, 2
      %s26 = sadd.s32 1, %s21
      %p27 = scmp.ge.s32.totalorder %s26, 1
      %s28 = scalar_select %p27, 0, %s26
      %s29 = sadd.s32 1, %s20
      %s30 = scalar_select %p27, %s29, %s20
      %p31 = scmp.ge.s32.totalorder %s30, 2
      %s32 = scalar_select %p31, 0, %s30
      %s33 = ssub.s32 %s20, %s32
      %s34 = ssub.s32 %s21, %s28
      %s35 = sor.u32 %s33, %s34
      %p36 = scmp.eq.s32.totalorder %s35, 0
      %s38 = sadd.s32 %s37, 1
      %s39 = scalar_select %p36, %s37, %s38
      %p42 = pneg %p36
      %p43 = scmp.eq.s32.totalorder %s13, 1
      %p44 = por %p42, %p43
      %p45 = scmp.ne.s32.totalorder %s37, %s40
      %p46 = scmp.eq.s32.totalorder %s13, 0
      %p47 = por %p45, %p46
      %p48 = scmp.ne.s32.totalorder %s37, %s40
      %p49 = scmp.eq.s32.totalorder %s18, 1
      %p50 = por %p48, %p49
      %p51 = scmp.ne.s32.totalorder %s40, %s41
      %p52 = scmp.eq.s32.totalorder %s18, 0
      %p53 = por %p51, %p52
      %p54 = scmp.ne.s32.totalorder %s40, %s41
      %p55 = scmp.eq.s32.totalorder %s19, 1
      %p56 = por %p54, %p55
      %p58 = scmp.ne.s32.totalorder %s41, %s57
      %p59 = scmp.eq.s32.totalorder %s19, 0
      %p60 = por %p58, %p59
      %s61 = ssub.s32 %s20, %s32
      %s62 = ssub.s32 %s21, %s28
      %s63 = sor.u32 %s61, %s62
      %p64 = scmp.eq.s32.totalorder %s63, 0
      %s66 = sadd.s32 %s65, 1
      %s67 = scalar_select %p64, %s65, %s66
      %p70 = pneg %p64
      %p71 = scmp.eq.s32.totalorder %s13, 1
      %p72 = por %p70, %p71
      %p73 = scmp.ne.s32.totalorder %s65, %s68
      %p74 = scmp.eq.s32.totalorder %s13, 0
      %p75 = por %p73, %p74
      %p76 = scmp.ne.s32.totalorder %s65, %s68
      %p77 = scmp.eq.s32.totalorder %s18, 1
      %p78 = por %p76, %p77
      %p79 = scmp.ne.s32.totalorder %s68, %s69
      %p80 = scmp.eq.s32.totalorder %s18, 0
      %p81 = por %p79, %p80
      %p82 = scmp.ne.s32.totalorder %s68, %s69
      %p83 = scmp.eq.s32.totalorder %s19, 1
      %p84 = por %p82, %p83
      %p86 = scmp.ne.s32.totalorder %s69, %s85
      %p87 = scmp.eq.s32.totalorder %s19, 0
      %p88 = por %p86, %p87
      %s90 = sadd.s32 %s89, 1
      %p93 = scmp.eq.s32.totalorder %s13, 1
      %p94 = scmp.ne.s32.totalorder %s89, %s91
      %p95 = scmp.eq.s32.totalorder %s13, 0
      %p96 = por %p94, %p95
      %p97 = scmp.ne.s32.totalorder %s89, %s91
      %p98 = scmp.eq.s32.totalorder %s18, 1
      %p99 = por %p97, %p98
      %p100 = scmp.ne.s32.totalorder %s91, %s92
      %p101 = scmp.eq.s32.totalorder %s18, 0
      %p102 = por %p100, %p101
      %p103 = scmp.ne.s32.totalorder %s91, %s92
      %p104 = scmp.eq.s32.totalorder %s19, 1
      %p105 = por %p103, %p104
      %p107 = scmp.ne.s32.totalorder %s92, %s106
      %p108 = scmp.eq.s32.totalorder %s19, 0
      %p109 = por %p107, %p108
      %s111 = sadd.s32 %s110, 1
      %p114 = scmp.eq.s32.totalorder %s13, 1
      %p115 = scmp.ne.s32.totalorder %s110, %s112
      %p116 = scmp.eq.s32.totalorder %s13, 0
      %p117 = por %p115, %p116
      %p118 = scmp.ne.s32.totalorder %s110, %s112
      %p119 = scmp.eq.s32.totalorder %s18, 1
      %p120 = por %p118, %p119
      %p121 = scmp.ne.s32.totalorder %s112, %s113
      %p122 = scmp.eq.s32.totalorder %s18, 0
      %p123 = por %p121, %p122
      %p124 = scmp.ne.s32.totalorder %s112, %s113
      %p125 = scmp.eq.s32.totalorder %s19, 1
      %p126 = por %p124, %p125
      %p128 = scmp.ne.s32.totalorder %s113, %s127
      %p129 = scmp.eq.s32.totalorder %s19, 0
      %p130 = por %p128, %p129
      %s131 = ssub.s32 %s20, %s32
      %s132 = ssub.s32 %s21, %s28
      %s133 = sor.u32 %s131, %s132
      %p134 = scmp.eq.s32.totalorder %s133, 0
      %s136 = sadd.s32 %s135, 1
      %s137 = scalar_select %p134, %s135, %s136
      %p140 = pneg %p134
      %p141 = scmp.eq.s32.totalorder %s13, 1
      %p142 = por %p140, %p141
      %p143 = scmp.ne.s32.totalorder %s135, %s138
      %p144 = scmp.eq.s32.totalorder %s13, 0
      %p145 = por %p143, %p144
      %p146 = scmp.ne.s32.totalorder %s135, %s138
      %p147 = scmp.eq.s32.totalorder %s18, 1
      %p148 = por %p146, %p147
      %p149 = scmp.ne.s32.totalorder %s138, %s139
      %p150 = scmp.eq.s32.totalorder %s18, 0
      %p151 = por %p149, %p150
      %p152 = scmp.ne.s32.totalorder %s138, %s139
      %p153 = scmp.eq.s32.totalorder %s19, 1
      %p154 = por %p152, %p153
      %p156 = scmp.ne.s32.totalorder %s139, %s155
      %p157 = scmp.eq.s32.totalorder %s19, 0
      %p158 = por %p156, %p157
      %p159 = scmp.le.s32.totalorder 1, %s13
      %p160 = scmp.lt.s32.totalorder %s13, 3
      %p161 = pnand %p159, %p160
      %p162 = pneg %p161
      // Predicated region
      $region9: #{sa_layer.3} parent=5 // pred_check
        _
      $region10: #{sa_layer.3} parent=5 // pred_check_branch
        %164 = sbr.rel (%p161) target = $region12
      $region11: #{sa_layer.3} parent=5 // pred_region
        %s165 = ssub.s32 %s13, 1
        // Predicated region
        $region13: #{sa_layer.3} parent=11 // pred_check
          %p166 = pneg %p102
        $region14: #{sa_layer.3} parent=11 // pred_check_branch
          %168 = sbr.rel (%p166) target = $region16
        $region15: #{sa_layer.3} parent=11 // pred_region
          _
        $region16: #{sa_layer.3} parent=11 // pred_fallthru
          _
        // Predicated region
        $region17: #{sa_layer.3} parent=11 // pred_check
          %p169 = pneg %p123
        $region18: #{sa_layer.3} parent=11 // pred_check_branch
          %171 = sbr.rel (%p169) target = $region20
        $region19: #{sa_layer.3} parent=11 // pred_region
          _
        $region20: #{sa_layer.3} parent=11 // pred_fallthru
          _
      $region12: #{sa_layer.3} parent=5 // pred_fallthru
        _
      %p172 = scmp.lt.s32.totalorder %s13, 2
      // Predicated region
      $region21: #{sa_layer.3} parent=5 // pred_check
        %p173 = pneg %p172
      $region22: #{sa_layer.3} parent=5 // pred_check_branch
        %175 = sbr.rel (%p173) target = $region24
      $region23: #{sa_layer.3} parent=5 // pred_region
        // Predicated region
        $region25: #{sa_layer.3} parent=23 // pred_check
          %p176 = pneg %p47
        $region26: #{sa_layer.3} parent=23 // pred_check_branch
          %178 = sbr.rel (%p176) target = $region28
        $region27: #{sa_layer.3} parent=23 // pred_region
          %s179 = smul.u32 2, %s21
          %p180 = scmp.lt.s32.totalorder %s20, 1
          %s181 = scalar_select %p180, %s20, 1
          %p182 = scmp.lt.s32.totalorder %s179, 1
          %s183 = scalar_select %p182, %s179, 1
          %s184 = smul.addr %s181, 16
          %s185 = sadd.s32 %s183, %s184
          %s186 = smul.addr %s185, 8
          %s187 = scalar_lea.vmem %s0, %s186
          %s188 = smul.u32 2, %s21
        $region28: #{sa_layer.3} parent=23 // pred_fallthru
          _
        // Predicated region
        $region29: #{sa_layer.3} parent=23 // pred_check
          %p189 = pneg %p75
        $region30: #{sa_layer.3} parent=23 // pred_check_branch
          %191 = sbr.rel (%p189) target = $region32
        $region31: #{sa_layer.3} parent=23 // pred_region
          %s192 = smul.u32 2, %s21
          %p193 = scmp.lt.s32.totalorder %s20, 1
          %s194 = scalar_select %p193, %s20, 1
          %p195 = scmp.lt.s32.totalorder %s192, 1
          %s196 = scalar_select %p195, %s192, 1
          %s197 = smul.addr %s194, 16
          %s198 = sadd.s32 %s196, %s197
          %s199 = smul.addr %s198, 8
          %s200 = scalar_lea.vmem %s1, %s199
          %s201 = smul.u32 2, %s21
        $region32: #{sa_layer.3} parent=23 // pred_fallthru
          _
      $region24: #{sa_layer.3} parent=5 // pred_fallthru
        _
      %p202 = scmp.le.s32.totalorder 1, %s13
      %p203 = scmp.lt.s32.totalorder %s13, 3
      %p204 = pnand %p202, %p203
      %p205 = pneg %p204
      // Predicated region
      $region33: #{sa_layer.3} parent=5 // pred_check
        _
      $region34: #{sa_layer.3} parent=5 // pred_check_branch
        %207 = sbr.rel (%p204) target = $region36
      $region35: #{sa_layer.3} parent=5 // pred_region
        %s208 = ssub.s32 %s13, 1
        %s209 = smul.u32 2, %s23
        %p210 = scmp.lt.s32.totalorder %s22, 1
        %s211 = scalar_select %p210, %s22, 1
        %p212 = scmp.lt.s32.totalorder %s209, 1
        %s213 = scalar_select %p212, %s209, 1
        %s214 = smul.addr %s211, 16
        %s215 = sadd.s32 %s213, %s214
        %s216 = smul.addr %s215, 8
        %s217 = scalar_lea.vmem %s0, %s216
        %p218 = pneg %p53
        %p219 = pneg %p50
        %s220 = smul.u32 2, %s23
        %p221 = scmp.lt.s32.totalorder %s22, 1
        %s222 = scalar_select %p221, %s22, 1
        %p223 = scmp.lt.s32.totalorder %s220, 1
        %s224 = scalar_select %p223, %s220, 1
        %s225 = smul.addr %s222, 16
        %s226 = sadd.s32 %s224, %s225
        %s227 = smul.addr %s226, 8
        %s228 = scalar_lea.vmem %s1, %s227
        %p229 = pneg %p81
        %p230 = pneg %p78
        %p231 = pneg %p102
        %p232 = pneg %p99
        %p233 = pneg %p123
        %p234 = pneg %p120
        %p235 = pneg %p151
        %p236 = pneg %p148
        %s237 = sand.u32 %s138, 1
        %s238 = scalar_lea.sflag [#allocation3], %s237
        %s239 = sand.u32 %s138, 1
        %s240 = smul.addr %s239, 128
        %s241 = scalar_lea.vmem [#allocation2], %s240
        %s242 = smul.u32 2, %s23
        %p243 = scmp.lt.s32.totalorder %s22, 1
        %s244 = scalar_select %p243, %s22, 1
        %p245 = scmp.lt.s32.totalorder %s242, 1
        %s246 = scalar_select %p245, %s242, 1
        %s247 = smul.addr %s244, 16
        %s248 = sadd.s32 %s246, %s247
        %s249 = smul.addr %s248, 8
        %s250 = scalar_lea.vmem %s0, %s249
        %s251 = smul.u32 2, %s23
        %s252 = smul.u32 2, %s23
        %p253 = scmp.lt.s32.totalorder %s22, 1
        %s254 = scalar_select %p253, %s22, 1
        %p255 = scmp.lt.s32.totalorder %s252, 1
        %s256 = scalar_select %p255, %s252, 1
        %s257 = smul.addr %s254, 16
        %s258 = sadd.s32 %s256, %s257
        %s259 = smul.addr %s258, 8
        %s260 = scalar_lea.vmem %s1, %s259
        %s261 = smul.u32 2, %s23
        %s262 = smul.u32 2, %s23
        %v263 = vld [vmem:[%s2] sm:$0xff]
        %v264 = vld [vmem:[%s2 + $0x8] sm:$0xff]
        %v265 = vld [vmem:[%s2 + $0x10] sm:$0xff]
        %v266 = vld [vmem:[%s2 + $0x18] sm:$0xff]
        %v267 = vld [vmem:[%s2 + $0x20] sm:$0xff]
        %v268 = vld [vmem:[%s2 + $0x28] sm:$0xff]
        %v269 = vld [vmem:[%s2 + $0x30] sm:$0xff]
        %v270 = vld [vmem:[%s2 + $0x38] sm:$0xff]
        %v271 = vld [vmem:[%s260] sm:$0xff]
        %v272 = vld [vmem:[%s260 + $0x8] sm:$0xff]
        %v273 = vld [vmem:[%s260 + $0x10] sm:$0xff]
        %v274 = vld [vmem:[%s260 + $0x18] sm:$0xff]
        %v275 = vld [vmem:[%s260 + $0x20] sm:$0xff]
        %v276 = vld [vmem:[%s260 + $0x28] sm:$0xff]
        %v277 = vld [vmem:[%s260 + $0x30] sm:$0xff]
        %v278 = vld [vmem:[%s260 + $0x38] sm:$0xff]
        %v279 = vld [vmem:[%s260 + $0x40] sm:$0xff]
        %v280 = vld [vmem:[%s260 + $0x48] sm:$0xff]
        %v281 = vld [vmem:[%s260 + $0x50] sm:$0xff]
        %v282 = vld [vmem:[%s260 + $0x58] sm:$0xff]
        %v283 = vld [vmem:[%s260 + $0x60] sm:$0xff]
        %v284 = vld [vmem:[%s260 + $0x68] sm:$0xff]
        %v285 = vld [vmem:[%s260 + $0x70] sm:$0xff]
        %v286 = vld [vmem:[%s260 + $0x78] sm:$0xff]
        %288 = vset.pattern.permute.xlu0 0
        %289 = vperm.xlu0 %288, %v263
        %v290 = vpop.permute.xlu0 %289
        %293 = vset.pattern.permute.xlu0 0
        %294 = vperm.xlu0 %293, %v264
        %v295 = vpop.permute.xlu0 %294
        %298 = vset.pattern.permute.xlu0 0
        %299 = vperm.xlu0 %298, %v265
        %v300 = vpop.permute.xlu0 %299
        %303 = vset.pattern.permute.xlu0 0
        %304 = vperm.xlu0 %303, %v266
        %v305 = vpop.permute.xlu0 %304
        %308 = vset.pattern.permute.xlu0 0
        %309 = vperm.xlu0 %308, %v267
        %v310 = vpop.permute.xlu0 %309
        %313 = vset.pattern.permute.xlu0 0
        %314 = vperm.xlu0 %313, %v268
        %v315 = vpop.permute.xlu0 %314
        %318 = vset.pattern.permute.xlu0 0
        %319 = vperm.xlu0 %318, %v269
        %v320 = vpop.permute.xlu0 %319
        %323 = vset.pattern.permute.xlu0 0
        %324 = vperm.xlu0 %323, %v270
        %v325 = vpop.permute.xlu0 %324
        %v327 = vmul.f32 %v290, %v271
        %v328 = vmul.f32 %v290, %v272
        %v329 = vmul.f32 %v295, %v273
        %v330 = vmul.f32 %v295, %v274
        %v331 = vmul.f32 %v300, %v275
        %v332 = vmul.f32 %v300, %v276
        %v333 = vmul.f32 %v305, %v277
        %v334 = vmul.f32 %v305, %v278
        %v335 = vmul.f32 %v310, %v279
        %v336 = vmul.f32 %v310, %v280
        %v337 = vmul.f32 %v315, %v281
        %v338 = vmul.f32 %v315, %v282
        %v339 = vmul.f32 %v320, %v283
        %v340 = vmul.f32 %v320, %v284
        %v341 = vmul.f32 %v325, %v285
        %v342 = vmul.f32 %v325, %v286
        %v343 = vld [vmem:[%s3] sm:$0xff]
        %v344 = vld [vmem:[%s3 + $0x8] sm:$0xff]
        %v345 = vld [vmem:[%s3 + $0x10] sm:$0xff]
        %v346 = vld [vmem:[%s3 + $0x18] sm:$0xff]
        %v347 = vld [vmem:[%s3 + $0x20] sm:$0xff]
        %v348 = vld [vmem:[%s3 + $0x28] sm:$0xff]
        %v349 = vld [vmem:[%s3 + $0x30] sm:$0xff]
        %v350 = vld [vmem:[%s3 + $0x38] sm:$0xff]
        %352 = vset.pattern.permute.xlu0 0
        %353 = vperm.xlu0 %352, %v343
        %v354 = vpop.permute.xlu0 %353
        %357 = vset.pattern.permute.xlu0 0
        %358 = vperm.xlu0 %357, %v344
        %v359 = vpop.permute.xlu0 %358
        %362 = vset.pattern.permute.xlu0 0
        %363 = vperm.xlu0 %362, %v345
        %v364 = vpop.permute.xlu0 %363
        %367 = vset.pattern.permute.xlu0 0
        %368 = vperm.xlu0 %367, %v346
        %v369 = vpop.permute.xlu0 %368
        %372 = vset.pattern.permute.xlu0 0
        %373 = vperm.xlu0 %372, %v347
        %v374 = vpop.permute.xlu0 %373
        %377 = vset.pattern.permute.xlu0 0
        %378 = vperm.xlu0 %377, %v348
        %v379 = vpop.permute.xlu0 %378
        %382 = vset.pattern.permute.xlu0 0
        %383 = vperm.xlu0 %382, %v349
        %v384 = vpop.permute.xlu0 %383
        %387 = vset.pattern.permute.xlu0 0
        %388 = vperm.xlu0 %387, %v350
        %v389 = vpop.permute.xlu0 %388
        %v391 = vadd.f32 %v327, %v354
        %v392 = vadd.f32 %v328, %v354
        %v393 = vadd.f32 %v329, %v359
        %v394 = vadd.f32 %v330, %v359
        %v395 = vadd.f32 %v331, %v364
        %v396 = vadd.f32 %v332, %v364
        %v397 = vadd.f32 %v333, %v369
        %v398 = vadd.f32 %v334, %v369
        %v399 = vadd.f32 %v335, %v374
        %v400 = vadd.f32 %v336, %v374
        %v401 = vadd.f32 %v337, %v379
        %v402 = vadd.f32 %v338, %v379
        %v403 = vadd.f32 %v339, %v384
        %v404 = vadd.f32 %v340, %v384
        %v405 = vadd.f32 %v341, %v389
        %v406 = vadd.f32 %v342, %v389
        %v407 = vld [vmem:[%s250] sm:$0xff]
        %v408 = vld [vmem:[%s250 + $0x8] sm:$0xff]
        %v409 = vld [vmem:[%s250 + $0x10] sm:$0xff]
        %v410 = vld [vmem:[%s250 + $0x18] sm:$0xff]
        %v411 = vld [vmem:[%s250 + $0x20] sm:$0xff]
        %v412 = vld [vmem:[%s250 + $0x28] sm:$0xff]
        %v413 = vld [vmem:[%s250 + $0x30] sm:$0xff]
        %v414 = vld [vmem:[%s250 + $0x38] sm:$0xff]
        %v415 = vld [vmem:[%s250 + $0x40] sm:$0xff]
        %v416 = vld [vmem:[%s250 + $0x48] sm:$0xff]
        %v417 = vld [vmem:[%s250 + $0x50] sm:$0xff]
        %v418 = vld [vmem:[%s250 + $0x58] sm:$0xff]
        %v419 = vld [vmem:[%s250 + $0x60] sm:$0xff]
        %v420 = vld [vmem:[%s250 + $0x68] sm:$0xff]
        %v421 = vld [vmem:[%s250 + $0x70] sm:$0xff]
        %v422 = vld [vmem:[%s250 + $0x78] sm:$0xff]
        %v423 = vmax.f32 %v391, 0.0
        %v424 = vmax.f32 %v392, 0.0
        %v425 = vmax.f32 %v393, 0.0
        %v426 = vmax.f32 %v394, 0.0
        %v427 = vmax.f32 %v395, 0.0
        %v428 = vmax.f32 %v396, 0.0
        %v429 = vmax.f32 %v397, 0.0
        %v430 = vmax.f32 %v398, 0.0
        %v431 = vmax.f32 %v399, 0.0
        %v432 = vmax.f32 %v400, 0.0
        %v433 = vmax.f32 %v401, 0.0
        %v434 = vmax.f32 %v402, 0.0
        %v435 = vmax.f32 %v403, 0.0
        %v436 = vmax.f32 %v404, 0.0
        %v437 = vmax.f32 %v405, 0.0
        %v438 = vmax.f32 %v406, 0.0
        %v439 = vadd.f32 %v407, %v423
        %v440 = vadd.f32 %v408, %v424
        %v441 = vadd.f32 %v409, %v425
        %v442 = vadd.f32 %v410, %v426
        %v443 = vadd.f32 %v411, %v427
        %v444 = vadd.f32 %v412, %v428
        %v445 = vadd.f32 %v413, %v429
        %v446 = vadd.f32 %v414, %v430
        %v447 = vadd.f32 %v415, %v431
        %v448 = vadd.f32 %v416, %v432
        %v449 = vadd.f32 %v417, %v433
        %v450 = vadd.f32 %v418, %v434
        %v451 = vadd.f32 %v419, %v435
        %v452 = vadd.f32 %v420, %v436
        %v453 = vadd.f32 %v421, %v437
        %v454 = vadd.f32 %v422, %v438
        %455 = vst [vmem:[%s241] sm:$0xff] %v439
        %456 = vst [vmem:[%s241 + $0x8] sm:$0xff] %v440
        %457 = vst [vmem:[%s241 + $0x10] sm:$0xff] %v441
        %458 = vst [vmem:[%s241 + $0x18] sm:$0xff] %v442
        %459 = vst [vmem:[%s241 + $0x20] sm:$0xff] %v443
        %460 = vst [vmem:[%s241 + $0x28] sm:$0xff] %v444
        %461 = vst [vmem:[%s241 + $0x30] sm:$0xff] %v445
        %462 = vst [vmem:[%s241 + $0x38] sm:$0xff] %v446
        %463 = vst [vmem:[%s241 + $0x40] sm:$0xff] %v447
        %464 = vst [vmem:[%s241 + $0x48] sm:$0xff] %v448
        %465 = vst [vmem:[%s241 + $0x50] sm:$0xff] %v449
        %466 = vst [vmem:[%s241 + $0x58] sm:$0xff] %v450
        %467 = vst [vmem:[%s241 + $0x60] sm:$0xff] %v451
        %468 = vst [vmem:[%s241 + $0x68] sm:$0xff] %v452
        %469 = vst [vmem:[%s241 + $0x70] sm:$0xff] %v453
        %470 = vst [vmem:[%s241 + $0x78] sm:$0xff] %v454
        %s471 = sand.u32 %s138, 1
        %s472 = scalar_lea.sflag [#allocation3], %s471
        %s473 = sand.u32 %s138, 1
        %s474 = smul.addr %s473, 128
        %s475 = scalar_lea.vmem [#allocation2], %s474
        // Predicated region
        $region37: #{sa_layer.3} parent=35 // pred_check
          %p476 = pneg %p148
        $region38: #{sa_layer.3} parent=35 // pred_check_branch
          %478 = sbr.rel (%p476) target = $region40
        $region39: #{sa_layer.3} parent=35 // pred_region
          %s479 = smul.u32 2, %s23
          %s481 = ssub.s32 2048, 2048
          %482 = vsyncadd %s472, %s481
          %s483 = smul.addr %s22, 16
          %s484 = sadd.s32 %s479, %s483
          %s485 = smul.addr %s484, 128
          %s486 = scalar_lea.hbm %s4, %s485
          %s487 = sshll.u32 %s475, 4
          %s488 = int_to_ptr.vmem [resolvable:$true] %s487
          %493 = dma.vmem_to_hbm [thread:$0]  %s488, 2048, %s486, %s472, 256, 256, 16
        $region40: #{sa_layer.3} parent=35 // pred_fallthru
          _
      $region36: #{sa_layer.3} parent=5 // pred_fallthru
        _
      %p494 = scmp.le.s32.totalorder 2, %s13
      // Predicated region
      $region41: #{sa_layer.3} parent=5 // pred_check
        %p495 = pneg %p494
      $region42: #{sa_layer.3} parent=5 // pred_check_branch
        %497 = sbr.rel (%p495) target = $region44
      $region43: #{sa_layer.3} parent=5 // pred_region
        %s498 = ssub.s32 %s13, 2
        // Predicated region
        $region45: #{sa_layer.3} parent=43 // pred_check
          %p499 = pneg %p154
        $region46: #{sa_layer.3} parent=43 // pred_check_branch
          %501 = sbr.rel (%p499) target = $region48
        $region47: #{sa_layer.3} parent=43 // pred_region
          %s502 = sand.u32 %s139, 1
          %s503 = scalar_lea.sflag [#allocation3], %s502
          %s504 = sand.u32 %s139, 1
          %s505 = smul.addr %s504, 128
          %s506 = scalar_lea.vmem [#allocation2], %s505
          %507 = dma.done %s503, 2048
        $region48: #{sa_layer.3} parent=43 // pred_fallthru
          _
      $region44: #{sa_layer.3} parent=5 // pred_fallthru
        _
    $region6: #{sa_layer.3} parent=1 // loop_footer
      %s17 = sadd.s32 1, %s13
    $region7: #{sa_layer.3} parent=1 // loop_footer_branch
      %12 = sbr.rel target = $region3
    $region8: #{sa_layer.3} parent=1 // loop_exit
      _
    %508 = vsyncpa [#allocation3], 1
    %s509 = scalar_lea.sflag [#allocation3], 1
    %510 = vsyncpa %s509, 1

// kernel: sa_layer.2
$region0: #{sa_layer.2}
  #allocation0 [shape = 'u32[]', space=smem, size = 0x4, offset = 0x4, fixed_abs, tag = 'smem constant byte address 0x4 - core index']
  #allocation1 [shape = 'u32[144,128]{1,0:T(1,128)}', space=vmem, size = 0x12000, scoped, tag = 'internal scratch']
  #allocation2 [shape = 'bf16[16,256]{1,0:T(8,128)(2,1)}', space=vmem, size = 0x2000, scoped, tag = 'scratch operand']
  #allocation3 [shape = 'f32[64,256]{1,0:T(8,128)}', space=vmem, size = 0x10000, scoped, tag = 'scratch operand']
  #allocation4 [shape = 'f32[1,256]{1,0:T(1,128)}', space=vmem, size = 0x400, scoped, tag = 'scratch operand']
  %s0 = inlined_call_operand.hbm [shape: f32[2,64,256], index: 0, kind: input, shape index: {}, may-alias: {0,1}]
  %s1 = inlined_call_operand.hbm [shape: f32[2,64,256], index: 1, kind: input, shape index: {}, may-alias: {0,1}]
  %s2 = inlined_call_operand.vmem [shape: bf16[16,64], index: 2, kind: input, shape index: {}]
  %s3 = inlined_call_operand.vmem [shape: bf16[64,64], index: 3, kind: input, shape index: {}]
  %s4 = inlined_call_operand.vmem [shape: f32[64,1], index: 4, kind: input, shape index: {}]
  %s5 = inlined_call_operand.vmem [shape: bf16[64,64], index: 5, kind: input, shape index: {}]
  %s6 = inlined_call_operand.vmem [shape: f32[64,1], index: 6, kind: input, shape index: {}]
  %s7 = inlined_call_operand.vmem [shape: f32[2,64,256], index: 7, kind: output, shape index: {0}]
  %s8 = inlined_call_operand.vmem [shape: f32[2,64,1], index: 8, kind: output, shape index: {1}]
  %s9 = inlined_call_operand.vmem [shape: f32[2,64,1], index: 9, kind: output, shape index: {2}]
  %10 = xla_tuple %s7, %s8, %s9
  %s11 = sld [smem:[#allocation0]]
  $region93: #{sa_layer.2} parent=0
    _
  %s13 = ssub.s32 1, %s11
  %s14 = scalar_select 0, %s13, %s11
  $region1: #{sa_layer.2} parent=0
    #allocation5 [shape = 'u8[131072]{0}', space=vmem, size = 0x20000, scoped, tag = 'input window, operand 0']
    #allocation6 [shape = 's32[2]{0}', space=sflag, size = 0x8, scoped, tag = 'scoped memory for sa_layer.2']
    #allocation7 [shape = 'u8[65536]{0}', space=vmem, size = 0x10000, scoped, tag = 'input window, operand 1']
    #allocation8 [shape = 's32[2]{0}', space=sflag, size = 0x8, scoped, tag = 'scoped memory for sa_layer.2']
    %15 = vsyncpa [#allocation6], 0
    %s16 = scalar_lea.sflag [#allocation6], 1
    %17 = vsyncpa %s16, 0
    %18 = vsyncpa [#allocation8], 0
    %s19 = scalar_lea.sflag [#allocation8], 1
    %20 = vsyncpa %s19, 0
    loop: start=0, step=1, limit=6
    $region2: #{sa_layer.2} parent=1 // loop_pre_header
      _
    $region3: #{sa_layer.2} parent=1 // loop_header
      %s22 = sphi 0, %s26
      %p23 = scmp.ge.s32.totalorder %s22, 6
      %s29 = sphi 0, %s41
      %s30 = sphi 0, %s37
      %s31 = sphi 0, %s29
      %s32 = sphi 0, %s30
      %s33 = sphi 0, %s31
      %s34 = sphi 0, %s32
      %s44 = sphi 0, %s46
      %s47 = sphi 0, %s44
      %s48 = sphi 0, %s47
      %s64 = sphi 0, %s48
      %s72 = sphi 0, %s74
      %s75 = sphi 0, %s72
      %s76 = sphi 0, %s75
      %s92 = sphi 0, %s76
      %s96 = sphi 0, %s96
      %s98 = sphi 0, %s96
      %s99 = sphi 0, %s98
      %s113 = sphi 0, %s99
      %s117 = sphi 0, %s117
      %s119 = sphi 0, %s117
      %s120 = sphi 0, %s119
      %s134 = sphi 0, %s120
      %s138 = sphi 0, %s138
      %s140 = sphi 0, %s138
      %s141 = sphi 0, %s140
      %s155 = sphi 0, %s141
      %s159 = sphi 0, %s159
      %s161 = sphi 0, %s159
      %s162 = sphi 0, %s161
      %s176 = sphi 0, %s162
      %s180 = sphi 0, %s180
      %s182 = sphi 0, %s180
      %s183 = sphi 0, %s182
      %s197 = sphi 0, %s183
      %s203 = sphi 0, %s205
      %s206 = sphi 0, %s203
      %s207 = sphi 0, %s206
      %s223 = sphi 0, %s207
      %s229 = sphi 0, %s231
      %s232 = sphi 0, %s229
      %s233 = sphi 0, %s232
      %s249 = sphi 0, %s233
      %s255 = sphi 0, %s257
      %s258 = sphi 0, %s255
      %s259 = sphi 0, %s258
      %s275 = sphi 0, %s259
    $region4: #{sa_layer.2} parent=1 // loop_header_branch
      %25 = sbr.rel (%p23) target = $region8
    $region5: #{sa_layer.2} parent=1 // loop_body
      %s27 = ssub.s32 %s22, 1
      %s28 = ssub.s32 %s22, 2
      %s35 = sadd.s32 1, %s30
      %p36 = scmp.ge.s32.totalorder %s35, 2
      %s37 = scalar_select %p36, 0, %s35
      %s38 = sadd.s32 1, %s29
      %s39 = scalar_select %p36, %s38, %s29
      %p40 = scmp.ge.s32.totalorder %s39, 2
      %s41 = scalar_select %p40, 0, %s39
      %s42 = ssub.s32 %s29, %s41
      %p43 = scmp.eq.s32.totalorder %s42, 0
      %s45 = sadd.s32 %s44, 1
      %s46 = scalar_select %p43, %s44, %s45
      %p49 = pneg %p43
      %p50 = scmp.eq.s32.totalorder %s22, 3
      %p51 = por %p49, %p50
      %p52 = scmp.ne.s32.totalorder %s44, %s47
      %p53 = scmp.eq.s32.totalorder %s22, 0
      %p54 = por %p52, %p53
      %p55 = scmp.ne.s32.totalorder %s44, %s47
      %p56 = scmp.eq.s32.totalorder %s27, 3
      %p57 = por %p55, %p56
      %p58 = scmp.ne.s32.totalorder %s47, %s48
      %p59 = scmp.eq.s32.totalorder %s27, 0
      %p60 = por %p58, %p59
      %p61 = scmp.ne.s32.totalorder %s47, %s48
      %p62 = scmp.eq.s32.totalorder %s28, 3
      %p63 = por %p61, %p62
      %p65 = scmp.ne.s32.totalorder %s48, %s64
      %p66 = scmp.eq.s32.totalorder %s28, 0
      %p67 = por %p65, %p66
      %s68 = ssub.s32 %s29, %s41
      %s69 = ssub.s32 %s30, %s37
      %s70 = sor.u32 %s68, %s69
      %p71 = scmp.eq.s32.totalorder %s70, 0
      %s73 = sadd.s32 %s72, 1
      %s74 = scalar_select %p71, %s72, %s73
      %p77 = pneg %p71
      %p78 = scmp.eq.s32.totalorder %s22, 3
      %p79 = por %p77, %p78
      %p80 = scmp.ne.s32.totalorder %s72, %s75
      %p81 = scmp.eq.s32.totalorder %s22, 0
      %p82 = por %p80, %p81
      %p83 = scmp.ne.s32.totalorder %s72, %s75
      %p84 = scmp.eq.s32.totalorder %s27, 3
      %p85 = por %p83, %p84
      %p86 = scmp.ne.s32.totalorder %s75, %s76
      %p87 = scmp.eq.s32.totalorder %s27, 0
      %p88 = por %p86, %p87
      %p89 = scmp.ne.s32.totalorder %s75, %s76
      %p90 = scmp.eq.s32.totalorder %s28, 3
      %p91 = por %p89, %p90
      %p93 = scmp.ne.s32.totalorder %s76, %s92
      %p94 = scmp.eq.s32.totalorder %s28, 0
      %p95 = por %p93, %p94
      %s97 = sadd.s32 %s96, 1
      %p100 = scmp.eq.s32.totalorder %s22, 3
      %p101 = scmp.ne.s32.totalorder %s96, %s98
      %p102 = scmp.eq.s32.totalorder %s22, 0
      %p103 = por %p101, %p102
      %p104 = scmp.ne.s32.totalorder %s96, %s98
      %p105 = scmp.eq.s32.totalorder %s27, 3
      %p106 = por %p104, %p105
      %p107 = scmp.ne.s32.totalorder %s98, %s99
      %p108 = scmp.eq.s32.totalorder %s27, 0
      %p109 = por %p107, %p108
      %p110 = scmp.ne.s32.totalorder %s98, %s99
      %p111 = scmp.eq.s32.totalorder %s28, 3
      %p112 = por %p110, %p111
      %p114 = scmp.ne.s32.totalorder %s99, %s113
      %p115 = scmp.eq.s32.totalorder %s28, 0
      %p116 = por %p114, %p115
      %s118 = sadd.s32 %s117, 1
      %p121 = scmp.eq.s32.totalorder %s22, 3
      %p122 = scmp.ne.s32.totalorder %s117, %s119
      %p123 = scmp.eq.s32.totalorder %s22, 0
      %p124 = por %p122, %p123
      %p125 = scmp.ne.s32.totalorder %s117, %s119
      %p126 = scmp.eq.s32.totalorder %s27, 3
      %p127 = por %p125, %p126
      %p128 = scmp.ne.s32.totalorder %s119, %s120
      %p129 = scmp.eq.s32.totalorder %s27, 0
      %p130 = por %p128, %p129
      %p131 = scmp.ne.s32.totalorder %s119, %s120
      %p132 = scmp.eq.s32.totalorder %s28, 3
      %p133 = por %p131, %p132
      %p135 = scmp.ne.s32.totalorder %s120, %s134
      %p136 = scmp.eq.s32.totalorder %s28, 0
      %p137 = por %p135, %p136
      %s139 = sadd.s32 %s138, 1
      %p142 = scmp.eq.s32.totalorder %s22, 3
      %p143 = scmp.ne.s32.totalorder %s138, %s140
      %p144 = scmp.eq.s32.totalorder %s22, 0
      %p145 = por %p143, %p144
      %p146 = scmp.ne.s32.totalorder %s138, %s140
      %p147 = scmp.eq.s32.totalorder %s27, 3
      %p148 = por %p146, %p147
      %p149 = scmp.ne.s32.totalorder %s140, %s141
      %p150 = scmp.eq.s32.totalorder %s27, 0
      %p151 = por %p149, %p150
      %p152 = scmp.ne.s32.totalorder %s140, %s141
      %p153 = scmp.eq.s32.totalorder %s28, 3
      %p154 = por %p152, %p153
      %p156 = scmp.ne.s32.totalorder %s141, %s155
      %p157 = scmp.eq.s32.totalorder %s28, 0
      %p158 = por %p156, %p157
      %s160 = sadd.s32 %s159, 1
      %p163 = scmp.eq.s32.totalorder %s22, 3
      %p164 = scmp.ne.s32.totalorder %s159, %s161
      %p165 = scmp.eq.s32.totalorder %s22, 0
      %p166 = por %p164, %p165
      %p167 = scmp.ne.s32.totalorder %s159, %s161
      %p168 = scmp.eq.s32.totalorder %s27, 3
      %p169 = por %p167, %p168
      %p170 = scmp.ne.s32.totalorder %s161, %s162
      %p171 = scmp.eq.s32.totalorder %s27, 0
      %p172 = por %p170, %p171
      %p173 = scmp.ne.s32.totalorder %s161, %s162
      %p174 = scmp.eq.s32.totalorder %s28, 3
      %p175 = por %p173, %p174
      %p177 = scmp.ne.s32.totalorder %s162, %s176
      %p178 = scmp.eq.s32.totalorder %s28, 0
      %p179 = por %p177, %p178
      %s181 = sadd.s32 %s180, 1
      %p184 = scmp.eq.s32.totalorder %s22, 3
      %p185 = scmp.ne.s32.totalorder %s180, %s182
      %p186 = scmp.eq.s32.totalorder %s22, 0
      %p187 = por %p185, %p186
      %p188 = scmp.ne.s32.totalorder %s180, %s182
      %p189 = scmp.eq.s32.totalorder %s27, 3
      %p190 = por %p188, %p189
      %p191 = scmp.ne.s32.totalorder %s182, %s183
      %p192 = scmp.eq.s32.totalorder %s27, 0
      %p193 = por %p191, %p192
      %p194 = scmp.ne.s32.totalorder %s182, %s183
      %p195 = scmp.eq.s32.totalorder %s28, 3
      %p196 = por %p194, %p195
      %p198 = scmp.ne.s32.totalorder %s183, %s197
      %p199 = scmp.eq.s32.totalorder %s28, 0
      %p200 = por %p198, %p199
      %s201 = ssub.s32 %s29, %s41
      %p202 = scmp.eq.s32.totalorder %s201, 0
      %s204 = sadd.s32 %s203, 1
      %s205 = scalar_select %p202, %s203, %s204
      %p208 = pneg %p202
      %p209 = scmp.eq.s32.totalorder %s22, 3
      %p210 = por %p208, %p209
      %p211 = scmp.ne.s32.totalorder %s203, %s206
      %p212 = scmp.eq.s32.totalorder %s22, 0
      %p213 = por %p211, %p212
      %p214 = scmp.ne.s32.totalorder %s203, %s206
      %p215 = scmp.eq.s32.totalorder %s27, 3
      %p216 = por %p214, %p215
      %p217 = scmp.ne.s32.totalorder %s206, %s207
      %p218 = scmp.eq.s32.totalorder %s27, 0
      %p219 = por %p217, %p218
      %p220 = scmp.ne.s32.totalorder %s206, %s207
      %p221 = scmp.eq.s32.totalorder %s28, 3
      %p222 = por %p220, %p221
      %p224 = scmp.ne.s32.totalorder %s207, %s223
      %p225 = scmp.eq.s32.totalorder %s28, 0
      %p226 = por %p224, %p225
      %s227 = ssub.s32 %s29, %s41
      %p228 = scmp.eq.s32.totalorder %s227, 0
      %s230 = sadd.s32 %s229, 1
      %s231 = scalar_select %p228, %s229, %s230
      %p234 = pneg %p228
      %p235 = scmp.eq.s32.totalorder %s22, 3
      %p236 = por %p234, %p235
      %p237 = scmp.ne.s32.totalorder %s229, %s232
      %p238 = scmp.eq.s32.totalorder %s22, 0
      %p239 = por %p237, %p238
      %p240 = scmp.ne.s32.totalorder %s229, %s232
      %p241 = scmp.eq.s32.totalorder %s27, 3
      %p242 = por %p240, %p241
      %p243 = scmp.ne.s32.totalorder %s232, %s233
      %p244 = scmp.eq.s32.totalorder %s27, 0
      %p245 = por %p243, %p244
      %p246 = scmp.ne.s32.totalorder %s232, %s233
      %p247 = scmp.eq.s32.totalorder %s28, 3
      %p248 = por %p246, %p247
      %p250 = scmp.ne.s32.totalorder %s233, %s249
      %p251 = scmp.eq.s32.totalorder %s28, 0
      %p252 = por %p250, %p251
      %s253 = ssub.s32 %s29, %s41
      %p254 = scmp.eq.s32.totalorder %s253, 0
      %s256 = sadd.s32 %s255, 1
      %s257 = scalar_select %p254, %s255, %s256
      %p260 = pneg %p254
      %p261 = scmp.eq.s32.totalorder %s22, 3
      %p262 = por %p260, %p261
      %p263 = scmp.ne.s32.totalorder %s255, %s258
      %p264 = scmp.eq.s32.totalorder %s22, 0
      %p265 = por %p263, %p264
      %p266 = scmp.ne.s32.totalorder %s255, %s258
      %p267 = scmp.eq.s32.totalorder %s27, 3
      %p268 = por %p266, %p267
      %p269 = scmp.ne.s32.totalorder %s258, %s259
      %p270 = scmp.eq.s32.totalorder %s27, 0
      %p271 = por %p269, %p270
      %p272 = scmp.ne.s32.totalorder %s258, %s259
      %p273 = scmp.eq.s32.totalorder %s28, 3
      %p274 = por %p272, %p273
      %p276 = scmp.ne.s32.totalorder %s259, %s275
      %p277 = scmp.eq.s32.totalorder %s28, 0
      %p278 = por %p276, %p277
      %p279 = scmp.le.s32.totalorder 1, %s22
      %p280 = scmp.lt.s32.totalorder %s22, 5
      %p281 = pnand %p279, %p280
      %p282 = pneg %p281
      // Predicated region
      $region9: #{sa_layer.2} parent=5 // pred_check
        _
      $region10: #{sa_layer.2} parent=5 // pred_check_branch
        %284 = sbr.rel (%p281) target = $region12
      $region11: #{sa_layer.2} parent=5 // pred_region
        %s285 = ssub.s32 %s22, 1
        // Predicated region
        $region13: #{sa_layer.2} parent=11 // pred_check
          %p286 = pneg %p109
        $region14: #{sa_layer.2} parent=11 // pred_check_branch
          %288 = sbr.rel (%p286) target = $region16
        $region15: #{sa_layer.2} parent=11 // pred_region
          _
        $region16: #{sa_layer.2} parent=11 // pred_fallthru
          _
        // Predicated region
        $region17: #{sa_layer.2} parent=11 // pred_check
          %p289 = pneg %p130
        $region18: #{sa_layer.2} parent=11 // pred_check_branch
          %291 = sbr.rel (%p289) target = $region20
        $region19: #{sa_layer.2} parent=11 // pred_region
          _
        $region20: #{sa_layer.2} parent=11 // pred_fallthru
          _
        // Predicated region
        $region21: #{sa_layer.2} parent=11 // pred_check
          %p292 = pneg %p151
        $region22: #{sa_layer.2} parent=11 // pred_check_branch
          %294 = sbr.rel (%p292) target = $region24
        $region23: #{sa_layer.2} parent=11 // pred_region
          _
        $region24: #{sa_layer.2} parent=11 // pred_fallthru
          _
        // Predicated region
        $region25: #{sa_layer.2} parent=11 // pred_check
          %p295 = pneg %p172
        $region26: #{sa_layer.2} parent=11 // pred_check_branch
          %297 = sbr.rel (%p295) target = $region28
        $region27: #{sa_layer.2} parent=11 // pred_region
          _
        $region28: #{sa_layer.2} parent=11 // pred_fallthru
          _
        // Predicated region
        $region29: #{sa_layer.2} parent=11 // pred_check
          %p298 = pneg %p193
        $region30: #{sa_layer.2} parent=11 // pred_check_branch
          %300 = sbr.rel (%p298) target = $region32
        $region31: #{sa_layer.2} parent=11 // pred_region
          _
        $region32: #{sa_layer.2} parent=11 // pred_fallthru
          _
      $region12: #{sa_layer.2} parent=5 // pred_fallthru
        _
      %p301 = scmp.lt.s32.totalorder %s22, 4
      // Predicated region
      $region33: #{sa_layer.2} parent=5 // pred_check
        %p302 = pneg %p301
      $region34: #{sa_layer.2} parent=5 // pred_check_branch
        %304 = sbr.rel (%p302) target = $region36
      $region35: #{sa_layer.2} parent=5 // pred_region
        // Predicated region
        $region37: #{sa_layer.2} parent=35 // pred_check
          %p305 = pneg %p54
        $region38: #{sa_layer.2} parent=35 // pred_check_branch
          %307 = sbr.rel (%p305) target = $region40
        $region39: #{sa_layer.2} parent=35 // pred_region
          %s308 = sand.u32 %s44, 1
          %s309 = scalar_lea.sflag [#allocation6], %s308
          %s310 = sand.u32 %s44, 1
          %s311 = smul.addr %s310, 128
          %s312 = scalar_lea.vmem [#allocation5], %s311
          %s314 = ssub.s32 2048, 2048
          %315 = vsyncadd %s309, %s314
          %s316 = smul.addr %s29, 16
          %s317 = smul.addr %s316, 128
          %s318 = scalar_lea.hbm %s0, %s317
          %s319 = sshll.u32 %s312, 4
          %s320 = int_to_ptr.vmem [resolvable:$true] %s319
          %325 = dma.hbm_to_vmem [thread:$0]  %s318, 2048, %s320, %s309, 256, 256, 16
        $region40: #{sa_layer.2} parent=35 // pred_fallthru
          _
        // Predicated region
        $region41: #{sa_layer.2} parent=35 // pred_check
          %p326 = pneg %p82
        $region42: #{sa_layer.2} parent=35 // pred_check_branch
          %328 = sbr.rel (%p326) target = $region44
        $region43: #{sa_layer.2} parent=35 // pred_region
          %s329 = sand.u32 %s72, 1
          %s330 = scalar_lea.sflag [#allocation8], %s329
          %s331 = sand.u32 %s72, 1
          %s332 = smul.addr %s331, 64
          %s333 = scalar_lea.vmem [#allocation7], %s332
          %s335 = ssub.s32 1024, 1024
          %336 = vsyncadd %s330, %s335
          %s337 = smul.addr %s29, 16
          %s338 = sadd.s32 %s30, %s337
          %s339 = smul.addr %s338, 128
          %s340 = scalar_lea.hbm %s1, %s339
          %s341 = sshll.u32 %s333, 4
          %s342 = int_to_ptr.vmem [resolvable:$true] %s341
          %347 = dma.hbm_to_vmem [thread:$0]  %s340, 1024, %s342, %s330, 256, 128, 8
        $region44: #{sa_layer.2} parent=35 // pred_fallthru
          _
      $region36: #{sa_layer.2} parent=5 // pred_fallthru
        _
      %p348 = scmp.le.s32.totalorder 1, %s22
      %p349 = scmp.lt.s32.totalorder %s22, 5
      %p350 = pnand %p348, %p349
      %p351 = pneg %p350
      // Predicated region
      $region45: #{sa_layer.2} parent=5 // pred_check
        _
      $region46: #{sa_layer.2} parent=5 // pred_check_branch
        %353 = sbr.rel (%p350) target = $region48
      $region47: #{sa_layer.2} parent=5 // pred_region
        %s354 = ssub.s32 %s22, 1
        %s355 = sand.u32 %s47, 1
        %s356 = scalar_lea.sflag [#allocation6], %s355
        %s357 = sand.u32 %s47, 1
        %s358 = smul.addr %s357, 128
        %s359 = scalar_lea.vmem [#allocation5], %s358
        // Predicated region
        $region49: #{sa_layer.2} parent=47 // pred_check
          %p360 = pneg %p60
        $region50: #{sa_layer.2} parent=47 // pred_check_branch
          %362 = sbr.rel (%p360) target = $region52
        $region51: #{sa_layer.2} parent=47 // pred_region
          %363 = dma.done %s356, 2048
        $region52: #{sa_layer.2} parent=47 // pred_fallthru
          _
        %s364 = sand.u32 %s75, 1
        %s365 = scalar_lea.sflag [#allocation8], %s364
        %s366 = sand.u32 %s75, 1
        %s367 = smul.addr %s366, 64
        %s368 = scalar_lea.vmem [#allocation7], %s367
        // Predicated region
        $region53: #{sa_layer.2} parent=47 // pred_check
          %p369 = pneg %p88
        $region54: #{sa_layer.2} parent=47 // pred_check_branch
          %371 = sbr.rel (%p369) target = $region56
        $region55: #{sa_layer.2} parent=47 // pred_region
          %372 = dma.done %s365, 1024
        $region56: #{sa_layer.2} parent=47 // pred_fallthru
          _
        %s373 = sand.u32 %s47, 1
        %s374 = scalar_lea.sflag [#allocation6], %s373
        %s375 = sand.u32 %s47, 1
        %s376 = smul.addr %s375, 128
        %s377 = scalar_lea.vmem [#allocation5], %s376
        %p378 = pneg %p60
        %p379 = pneg %p57
        %s380 = sand.u32 %s75, 1
        %s381 = scalar_lea.sflag [#allocation8], %s380
        %s382 = sand.u32 %s75, 1
        %s383 = smul.addr %s382, 64
        %s384 = scalar_lea.vmem [#allocation7], %s383
        %p385 = pneg %p88
        %p386 = pneg %p85
        %p387 = pneg %p109
        %p388 = pneg %p106
        %p389 = pneg %p130
        %p390 = pneg %p127
        %p391 = pneg %p151
        %p392 = pneg %p148
        %p393 = pneg %p172
        %p394 = pneg %p169
        %p395 = pneg %p193
        %p396 = pneg %p190
        %p397 = pneg %p219
        %p398 = pneg %p216
        %p399 = scmp.lt.s32.totalorder %s31, 1
        %s400 = scalar_select %p399, %s31, 1
        %s401 = smul.addr %s400, 16
        %s402 = smul.addr %s401, 8
        %s403 = scalar_lea.vmem %s7, %s402
        %p404 = pneg %p245
        %p405 = pneg %p242
        %p406 = scmp.lt.s32.totalorder %s31, 1
        %s407 = scalar_select %p406, %s31, 1
        %s408 = smul.addr %s407, 8
        %s409 = smul.addr %s408, 8
        %s410 = scalar_lea.vmem %s8, %s409
        %p411 = pneg %p271
        %p412 = pneg %p268
        %p413 = scmp.lt.s32.totalorder %s31, 1
        %s414 = scalar_select %p413, %s31, 1
        %s415 = smul.addr %s414, 8
        %s416 = smul.addr %s415, 8
        %s417 = scalar_lea.vmem %s9, %s416
        %p418 = scmp.lt.s32.totalorder %s31, 1
        %s419 = scalar_select %p418, %s31, 1
        %s420 = smul.addr %s419, 16
        %s421 = smul.addr %s420, 8
        %s422 = scalar_lea.vmem %s7, %s421
        %p423 = scmp.lt.s32.totalorder %s31, 1
        %s424 = scalar_select %p423, %s31, 1
        %s425 = smul.addr %s424, 8
        %s426 = smul.addr %s425, 8
        %s427 = scalar_lea.vmem %s8, %s426
        %p428 = scmp.lt.s32.totalorder %s31, 1
        %s429 = scalar_select %p428, %s31, 1
        %s430 = smul.addr %s429, 8
        %s431 = smul.addr %s430, 8
        %s432 = scalar_lea.vmem %s9, %s431
        %p434 = scmp.eq.s32.totalorder %s32, 0
        // Predicated region
        $region57: #{sa_layer.2} parent=47 // pred_check
          %p435 = pneg %p434
        $region58: #{sa_layer.2} parent=47 // pred_check_branch
          %437 = sbr.rel (%p435) target = $region60
        $region59: #{sa_layer.2} parent=47 // pred_region
          %v438 = vld [vmem:[%s359] sm:$0xff]
          %v439 = vld [vmem:[%s359 + $0x8] sm:$0xff]
          %v440 = vld [vmem:[%s359 + $0x10] sm:$0xff]
          %v441 = vld [vmem:[%s359 + $0x18] sm:$0xff]
          %v442 = vld [vmem:[%s359 + $0x20] sm:$0xff]
          %v443 = vld [vmem:[%s359 + $0x28] sm:$0xff]
          %v444 = vld [vmem:[%s359 + $0x30] sm:$0xff]
          %v445 = vld [vmem:[%s359 + $0x38] sm:$0xff]
          %v446 = vld [vmem:[%s359 + $0x40] sm:$0xff]
          %v447 = vld [vmem:[%s359 + $0x48] sm:$0xff]
          %v448 = vld [vmem:[%s359 + $0x50] sm:$0xff]
          %v449 = vld [vmem:[%s359 + $0x58] sm:$0xff]
          %v450 = vld [vmem:[%s359 + $0x60] sm:$0xff]
          %v451 = vld [vmem:[%s359 + $0x68] sm:$0xff]
          %v452 = vld [vmem:[%s359 + $0x70] sm:$0xff]
          %v453 = vld [vmem:[%s359 + $0x78] sm:$0xff]
          %v454 = vpack.c.bf16 %v440, %v438
          %v455 = vpack.c.bf16 %v441, %v439
          %v456 = vpack.c.bf16 %v444, %v442
          %v457 = vpack.c.bf16 %v445, %v443
          %v458 = vpack.c.bf16 %v448, %v446
          %v459 = vpack.c.bf16 %v449, %v447
          %v460 = vpack.c.bf16 %v452, %v450
          %v461 = vpack.c.bf16 %v453, %v451
          %v462 = vld [vmem:[%s2] sm:$0xf]
          %v463 = vld [vmem:[%s2 + $0x4] sm:$0xf]
          %v466 = vunpack.c.l.b16 %v462
          %v467 = vunpack.c.l.b16 %v463
          %v468 = vpack.c.b16 %v467, %v466
          %vm469 = vcmask 523264
          %v471 = vsel %vm469, %v468, 0
          %473 = vmatprep.subr.bf16.mxu0 0
          %474 = vmatpush1.bf16.msra.mxu0 0
          %475 = vmatprep.subr.bf16.mxu0 0
          %476 = vmatpush1.bf16.msra.mxu0 0
          %477 = vmatprep.subr.bf16.mxu0 0
          %478 = vmatpush1.bf16.msra.mxu0 0
          %479 = vmatprep.subr.bf16.mxu0 0
          %480 = vmatpush1.bf16.msra.mxu0 0
          %481 = vmatprep.subr.bf16.mxu0 %v461
          %482 = vmatpush1.bf16.msra.mxu0 %v460
          %483 = vmatprep.subr.bf16.mxu0 %v459
          %484 = vmatpush1.bf16.msra.mxu0 %v458
          %485 = vmatprep.subr.bf16.mxu0 %v457
          %486 = vmatpush1.bf16.msra.mxu0 %v456
          %487 = vmatprep.subr.bf16.mxu0 %v455
          %488 = vmatpush1.bf16.msra.mxu0 %v454
          %489 = vmatprep.subr.bf16.mxu0 0
          %490 = vmatpush2.bf16.msra.mxu0 0
          %491 = vmatprep.subr.bf16.mxu0 0
          %492 = vmatpush2.bf16.msra.mxu0 0
          %493 = vmatprep.subr.bf16.mxu0 0
          %494 = vmatpush2.bf16.msra.mxu0 0
          %495 = vmatprep.subr.bf16.mxu0 0
          %496 = vmatpush2.bf16.msra.mxu0 0
          %497 = vmatprep.subr.bf16.mxu0 0
          %498 = vmatpush2.bf16.msra.mxu0 0
          %499 = vmatprep.subr.bf16.mxu0 0
          %500 = vmatpush2.bf16.msra.mxu0 0
          %501 = vmatprep.subr.bf16.mxu0 0
          %502 = vmatpush2.bf16.msra.mxu0 0
          %503 = vmatprep.subr.bf16.mxu0 0
          %504 = vmatpush2.bf16.msra.mxu0 0
          %505 = vmatprep.mubr.bf16.mxu0 0
          %506 = vmatmul.mubr.bf16.gmra.mxu0 %v471
          %v507 = vpop.f32.mrf.mxu0
          %v508 = vadd.f32 0.0, %v507
          %v509 = vpop.f32.mrf.mxu0
          %v510 = vadd.f32 0.0, %v509
          %v511 = vpop.f32.mrf.mxu0
          %v512 = vadd.f32 0.0, %v511
          %v513 = vpop.f32.mrf.mxu0
          %v514 = vadd.f32 0.0, %v513
          %515 = vdwg.mxu0
          %v516 = vpack.c.bf16 %v512, %v508
          %v517 = vpack.c.bf16 %v514, %v510
          %v520 = vunpack.c.l.b16 %v516
          %v521 = vunpack.c.l.b16 %v517
          %v522 = vunpack.c.h.b16 %v516
          %v523 = vunpack.c.h.b16 %v517
          %v524 = vpack.c.b16 %v521, %v520
          %v525 = vpack.c.b16 %v523, %v522
          %528 = vst [vmem:[#allocation2] sm:$0xff] %v524
          %529 = vst [vmem:[#allocation2 + $0x8] sm:$0xff] %v525
          %530 = vst [vmem:[#allocation3] sm:$0xff] 0.0
          %531 = vst [vmem:[#allocation3 + $0x8] sm:$0xff] 0.0
          %532 = vst [vmem:[#allocation3 + $0x10] sm:$0xff] 0.0
          %533 = vst [vmem:[#allocation3 + $0x18] sm:$0xff] 0.0
          %534 = vst [vmem:[#allocation3 + $0x20] sm:$0xff] 0.0
          %535 = vst [vmem:[#allocation3 + $0x28] sm:$0xff] 0.0
          %536 = vst [vmem:[#allocation3 + $0x30] sm:$0xff] 0.0
          %537 = vst [vmem:[#allocation3 + $0x38] sm:$0xff] 0.0
          %538 = vst [vmem:[#allocation3 + $0x40] sm:$0xff] 0.0
          %539 = vst [vmem:[#allocation3 + $0x48] sm:$0xff] 0.0
          %540 = vst [vmem:[#allocation3 + $0x50] sm:$0xff] 0.0
          %541 = vst [vmem:[#allocation3 + $0x58] sm:$0xff] 0.0
          %542 = vst [vmem:[#allocation3 + $0x60] sm:$0xff] 0.0
          %543 = vst [vmem:[#allocation3 + $0x68] sm:$0xff] 0.0
          %544 = vst [vmem:[#allocation3 + $0x70] sm:$0xff] 0.0
          %545 = vst [vmem:[#allocation3 + $0x78] sm:$0xff] 0.0
          %v546 = vlaneseq
          %vm547 = vcmp.ge.s32.totalorder %v546, 0
          %vm548 = vcmp.lt.s32.totalorder %v546, 256
          %vm549 = vmand %vm547, %vm548
          %550 = vst.msk [vmem:[#allocation4] sm:$0x3] %vm549, 0.0
        $region60: #{sa_layer.2} parent=47 // pred_fallthru
          _
        %v551 = vld [vmem:[%s368] sm:$0xff]
        %v552 = vld [vmem:[%s368 + $0x8] sm:$0xff]
        %v553 = vld [vmem:[%s368 + $0x10] sm:$0xff]
        %v554 = vld [vmem:[%s368 + $0x18] sm:$0xff]
        %v555 = vld [vmem:[%s368 + $0x20] sm:$0xff]
        %v556 = vld [vmem:[%s368 + $0x28] sm:$0xff]
        %v557 = vld [vmem:[%s368 + $0x30] sm:$0xff]
        %v558 = vld [vmem:[%s368 + $0x38] sm:$0xff]
        %v559 = vpack.c.bf16 %v552, %v551
        %v560 = vpack.c.bf16 %v554, %v553
        %v561 = vpack.c.bf16 %v556, %v555
        %v562 = vpack.c.bf16 %v558, %v557
        %v563 = vld [vmem:[%s2] sm:$0xf]
        %v564 = vld [vmem:[%s2 + $0x4] sm:$0xf]
        %v567 = vunpack.c.l.b16 %v563
        %v568 = vunpack.c.l.b16 %v564
        %v569 = vpack.c.b16 %v568, %v567
        %vm570 = vcmask 523264
        %v572 = vsel %vm570, %v569, 0
        %574 = vmatprep.subr.bf16.mxu0 0
        %575 = vmatpush1.bf16.msra.mxu0 0
        %576 = vmatprep.subr.bf16.mxu0 0
        %577 = vmatpush1.bf16.msra.mxu0 0
        %578 = vmatprep.subr.bf16.mxu0 0
        %579 = vmatpush1.bf16.msra.mxu0 0
        %580 = vmatprep.subr.bf16.mxu0 0
        %581 = vmatpush1.bf16.msra.mxu0 0
        %582 = vmatprep.subr.bf16.mxu0 0
        %583 = vmatpush1.bf16.msra.mxu0 %v562
        %584 = vmatprep.subr.bf16.mxu0 0
        %585 = vmatpush1.bf16.msra.mxu0 %v561
        %586 = vmatprep.subr.bf16.mxu0 0
        %587 = vmatpush1.bf16.msra.mxu0 %v560
        %588 = vmatprep.subr.bf16.mxu0 0
        %589 = vmatpush1.bf16.msra.mxu0 %v559
        %590 = vmatprep.subr.bf16.mxu0 0
        %591 = vmatpush2.bf16.msra.mxu0 0
        %592 = vmatprep.subr.bf16.mxu0 0
        %593 = vmatpush2.bf16.msra.mxu0 0
        %594 = vmatprep.subr.bf16.mxu0 0
        %595 = vmatpush2.bf16.msra.mxu0 0
        %596 = vmatprep.subr.bf16.mxu0 0
        %597 = vmatpush2.bf16.msra.mxu0 0
        %598 = vmatprep.subr.bf16.mxu0 0
        %599 = vmatpush2.bf16.msra.mxu0 0
        %600 = vmatprep.subr.bf16.mxu0 0
        %601 = vmatpush2.bf16.msra.mxu0 0
        %602 = vmatprep.subr.bf16.mxu0 0
        %603 = vmatpush2.bf16.msra.mxu0 0
        %604 = vmatprep.subr.bf16.mxu0 0
        %605 = vmatpush2.bf16.msra.mxu0 0
        %606 = vmatprep.mubr.bf16.mxu0 0
        %607 = vmatmul.mubr.bf16.gmra.mxu0 %v572
        %v608 = vpop.f32.mrf.mxu0
        %v609 = vadd.f32 0.0, %v608
        %v610 = vpop.f32.mrf.mxu0
        %v611 = vpop.f32.mrf.mxu0
        %v612 = vadd.f32 0.0, %v611
        %v613 = vpop.f32.mrf.mxu0
        %614 = vdwg.mxu0
        %v615 = vld [vmem:[%s3] sm:$0xf]
        %v616 = vld [vmem:[%s3 + $0x4] sm:$0xf]
        %v617 = vld [vmem:[%s3 + $0x8] sm:$0xf]
        %v618 = vld [vmem:[%s3 + $0xc] sm:$0xf]
        %v619 = vld [vmem:[%s3 + $0x10] sm:$0xf]
        %v620 = vld [vmem:[%s3 + $0x14] sm:$0xf]
        %v621 = vld [vmem:[%s3 + $0x18] sm:$0xf]
        %v622 = vld [vmem:[%s3 + $0x1c] sm:$0xf]
        %v623 = vld [vmem:[%s4] sm:$0xff]
        %v624 = vld [vmem:[%s4 + $0x8] sm:$0xff]
        %v625 = vld [vmem:[%s4 + $0x10] sm:$0xff]
        %v626 = vld [vmem:[%s4 + $0x18] sm:$0xff]
        %v627 = vld [vmem:[%s4 + $0x20] sm:$0xff]
        %v628 = vld [vmem:[%s4 + $0x28] sm:$0xff]
        %v629 = vld [vmem:[%s4 + $0x30] sm:$0xff]
        %v630 = vld [vmem:[%s4 + $0x38] sm:$0xff]
        %632 = vset.pattern.permute.xlu0 0
        %633 = vperm.xlu0 %632, %v623
        %v634 = vpop.permute.xlu0 %633
        %637 = vset.pattern.permute.xlu0 0
        %638 = vperm.xlu0 %637, %v624
        %v639 = vpop.permute.xlu0 %638
        %642 = vset.pattern.permute.xlu0 0
        %643 = vperm.xlu0 %642, %v625
        %v644 = vpop.permute.xlu0 %643
        %647 = vset.pattern.permute.xlu0 0
        %648 = vperm.xlu0 %647, %v626
        %v649 = vpop.permute.xlu0 %648
        %652 = vset.pattern.permute.xlu0 0
        %653 = vperm.xlu0 %652, %v627
        %v654 = vpop.permute.xlu0 %653
        %657 = vset.pattern.permute.xlu0 0
        %658 = vperm.xlu0 %657, %v628
        %v659 = vpop.permute.xlu0 %658
        %662 = vset.pattern.permute.xlu0 0
        %663 = vperm.xlu0 %662, %v629
        %v664 = vpop.permute.xlu0 %663
        %667 = vset.pattern.permute.xlu0 0
        %668 = vperm.xlu0 %667, %v630
        %v669 = vpop.permute.xlu0 %668
        %v679 = vunpack.c.l.b16 %v615
        %v680 = vunpack.c.l.b16 %v616
        %v681 = vunpack.c.l.b16 %v617
        %v682 = vunpack.c.l.b16 %v618
        %v683 = vunpack.c.l.b16 %v619
        %v684 = vunpack.c.l.b16 %v620
        %v685 = vunpack.c.l.b16 %v621
        %v686 = vunpack.c.l.b16 %v622
        %v687 = vpack.c.b16 %v680, %v679
        %v688 = vpack.c.b16 %v682, %v681
        %v689 = vpack.c.b16 %v684, %v683
        %v690 = vpack.c.b16 %v686, %v685
        %v692 = vsel %vm570, %v687, 0
        %v695 = vsel %vm570, %v688, 0
        %v698 = vsel %vm570, %v689, 0
        %v701 = vsel %vm570, %v690, 0
        %703 = vmatprep.subr.bf16.mxu0 0
        %704 = vmatpush1.bf16.msra.mxu0 0
        %705 = vmatprep.subr.bf16.mxu0 0
        %706 = vmatpush1.bf16.msra.mxu0 0
        %707 = vmatprep.subr.bf16.mxu0 0
        %708 = vmatpush1.bf16.msra.mxu0 0
        %709 = vmatprep.subr.bf16.mxu0 0
        %710 = vmatpush1.bf16.msra.mxu0 0
        %711 = vmatprep.subr.bf16.mxu0 0
        %712 = vmatpush1.bf16.msra.mxu0 %v562
        %713 = vmatprep.subr.bf16.mxu0 0
        %714 = vmatpush1.bf16.msra.mxu0 %v561
        %715 = vmatprep.subr.bf16.mxu0 0
        %716 = vmatpush1.bf16.msra.mxu0 %v560
        %717 = vmatprep.subr.bf16.mxu0 0
        %718 = vmatpush1.bf16.msra.mxu0 %v559
        %719 = vmatprep.subr.bf16.mxu0 0
        %720 = vmatpush2.bf16.msra.mxu0 0
        %721 = vmatprep.subr.bf16.mxu0 0
        %722 = vmatpush2.bf16.msra.mxu0 0
        %723 = vmatprep.subr.bf16.mxu0 0
        %724 = vmatpush2.bf16.msra.mxu0 0
        %725 = vmatprep.subr.bf16.mxu0 0
        %726 = vmatpush2.bf16.msra.mxu0 0
        %727 = vmatprep.subr.bf16.mxu0 0
        %728 = vmatpush2.bf16.msra.mxu0 0
        %729 = vmatprep.subr.bf16.mxu0 0
        %730 = vmatpush2.bf16.msra.mxu0 0
        %731 = vmatprep.subr.bf16.mxu0 0
        %732 = vmatpush2.bf16.msra.mxu0 0
        %733 = vmatprep.subr.bf16.mxu0 0
        %734 = vmatpush2.bf16.msra.mxu0 0
        %735 = vmatprep.mubr.bf16.mxu0 0
        %736 = vmatmul.mubr.bf16.gmra.mxu0 %v692
        %v737 = vpop.f32.mrf.mxu0
        %v738 = vadd.f32 %v634, %v737
        %v739 = vpop.f32.mrf.mxu0
        %v740 = vpop.f32.mrf.mxu0
        %v741 = vadd.f32 %v639, %v740
        %v742 = vpop.f32.mrf.mxu0
        %743 = vmatprep.mubr.bf16.mxu0 0
        %744 = vmatmul.mubr.bf16.gmra.mxu0 %v695
        %v745 = vpop.f32.mrf.mxu0
        %v746 = vadd.f32 %v644, %v745
        %v747 = vpop.f32.mrf.mxu0
        %v748 = vpop.f32.mrf.mxu0
        %v749 = vadd.f32 %v649, %v748
        %v750 = vpop.f32.mrf.mxu0
        %751 = vmatprep.mubr.bf16.mxu0 0
        %752 = vmatmul.mubr.bf16.gmra.mxu0 %v698
        %v753 = vpop.f32.mrf.mxu0
        %v754 = vadd.f32 %v654, %v753
        %v755 = vpop.f32.mrf.mxu0
        %v756 = vpop.f32.mrf.mxu0
        %v757 = vadd.f32 %v659, %v756
        %v758 = vpop.f32.mrf.mxu0
        %759 = vmatprep.mubr.bf16.mxu0 0
        %760 = vmatmul.mubr.bf16.gmra.mxu0 %v701
        %v761 = vpop.f32.mrf.mxu0
        %v762 = vadd.f32 %v664, %v761
        %v763 = vpop.f32.mrf.mxu0
        %v764 = vpop.f32.mrf.mxu0
        %v765 = vadd.f32 %v669, %v764
        %v766 = vpop.f32.mrf.mxu0
        %767 = vdwg.mxu0
        %v768 = vpack.c.bf16 %v612, %v609
        %v769 = vld [vmem:[#allocation2] sm:$0xff]
        %v770 = vld [vmem:[#allocation2 + $0x8] sm:$0xff]
        %771 = vxpose.xlu0.c.b16.start [1/8] %v768, 128
        %772 = vxpose.xlu0.c.b16.cont [2/8] 0, 128
        %773 = vxpose.xlu0.c.b16.cont [3/8] 0, 128
        %774 = vxpose.xlu0.c.b16.cont [4/8] 0, 128
        %775 = vxpose.xlu0.c.b16.cont [5/8] 0, 128
        %776 = vxpose.xlu0.c.b16.cont [6/8] 0, 128
        %777 = vxpose.xlu0.c.b16.cont [7/8] 0, 128
        %778 = vxpose.xlu0.c.b16.end [8/8] 0, 128
        %v779 = vpop.trf.xlu0
        %v780 = vpop.trf.xlu0
        %v781 = vpop.trf.xlu0
        %v782 = vpop.trf.xlu0
        %v783 = vpop.trf.xlu0
        %v784 = vpop.trf.xlu0
        %v785 = vpop.trf.xlu0
        %v786 = vpop.trf.xlu0
        %v789 = vunpack.c.l.b16 %v769
        %v790 = vunpack.c.h.b16 %v769
        %v791 = vunpack.c.l.b16 %v770
        %v792 = vunpack.c.h.b16 %v770
        %v793 = vpack.c.b16 %v791, %v789
        %v794 = vpack.c.b16 %v792, %v790
        %vm797 = vcmask 130048
        %v799 = vsel %vm797, %v779, 0
        %v802 = vsel %vm797, %v780, 0
        %v805 = vsel %vm797, %v781, 0
        %v808 = vsel %vm797, %v782, 0
        %v811 = vsel %vm797, %v783, 0
        %v814 = vsel %vm797, %v784, 0
        %v817 = vsel %vm797, %v785, 0
        %v820 = vsel %vm797, %v786, 0
        %822 = vmatprep.subr.bf16.mxu0 0
        %823 = vmatpush1.bf16.msra.mxu0 0
        %824 = vmatprep.subr.bf16.mxu0 0
        %825 = vmatpush1.bf16.msra.mxu0 0
        %826 = vmatprep.subr.bf16.mxu0 0
        %827 = vmatpush1.bf16.msra.mxu0 0
        %828 = vmatprep.subr.bf16.mxu0 0
        %829 = vmatpush1.bf16.msra.mxu0 0
        %830 = vmatprep.subr.bf16.mxu0 0
        %831 = vmatpush1.bf16.msra.mxu0 0
        %832 = vmatprep.subr.bf16.mxu0 0
        %833 = vmatpush1.bf16.msra.mxu0 0
        %834 = vmatprep.subr.bf16.mxu0 0
        %835 = vmatpush1.bf16.msra.mxu0 0
        %836 = vmatprep.subr.bf16.mxu0 %v794
        %837 = vmatpush1.bf16.msra.mxu0 %v793
        %838 = vmatprep.subr.bf16.mxu0 0
        %839 = vmatpush2.bf16.msra.mxu0 0
        %840 = vmatprep.subr.bf16.mxu0 0
        %841 = vmatpush2.bf16.msra.mxu0 0
        %842 = vmatprep.subr.bf16.mxu0 0
        %843 = vmatpush2.bf16.msra.mxu0 0
        %844 = vmatprep.subr.bf16.mxu0 0
        %845 = vmatpush2.bf16.msra.mxu0 0
        %846 = vmatprep.subr.bf16.mxu0 0
        %847 = vmatpush2.bf16.msra.mxu0 0
        %848 = vmatprep.subr.bf16.mxu0 0
        %849 = vmatpush2.bf16.msra.mxu0 0
        %850 = vmatprep.subr.bf16.mxu0 0
        %851 = vmatpush2.bf16.msra.mxu0 0
        %852 = vmatprep.subr.bf16.mxu0 0
        %853 = vmatpush2.bf16.msra.mxu0 0
        %854 = vmatprep.mubr.bf16.mxu0 0
        %855 = vmatmul.mubr.bf16.gmra.mxu0 %v799
        %v856 = vpop.f32.mrf.mxu0
        %v857 = vadd.f32 0.0, %v856
        %v858 = vpop.f32.mrf.mxu0
        %v859 = vadd.f32 0.0, %v858
        %v860 = vpop.f32.mrf.mxu0
        %v861 = vadd.f32 0.0, %v860
        %v862 = vpop.f32.mrf.mxu0
        %v863 = vadd.f32 0.0, %v862
        %864 = vmatprep.mubr.bf16.mxu0 0
        %865 = vmatmul.mubr.bf16.gmra.mxu0 %v802
        %v866 = vpop.f32.mrf.mxu0
        %v867 = vadd.f32 0.0, %v866
        %v868 = vpop.f32.mrf.mxu0
        %v869 = vadd.f32 0.0, %v868
        %v870 = vpop.f32.mrf.mxu0
        %v871 = vadd.f32 0.0, %v870
        %v872 = vpop.f32.mrf.mxu0
        %v873 = vadd.f32 0.0, %v872
        %874 = vmatprep.mubr.bf16.mxu0 0
        %875 = vmatmul.mubr.bf16.gmra.mxu0 %v805
        %v876 = vpop.f32.mrf.mxu0
        %v877 = vadd.f32 0.0, %v876
        %v878 = vpop.f32.mrf.mxu0
        %v879 = vadd.f32 0.0, %v878
        %v880 = vpop.f32.mrf.mxu0
        %v881 = vadd.f32 0.0, %v880
        %v882 = vpop.f32.mrf.mxu0
        %v883 = vadd.f32 0.0, %v882
        %884 = vmatprep.mubr.bf16.mxu0 0
        %885 = vmatmul.mubr.bf16.gmra.mxu0 %v808
        %v886 = vpop.f32.mrf.mxu0
        %v887 = vadd.f32 0.0, %v886
        %v888 = vpop.f32.mrf.mxu0
        %v889 = vadd.f32 0.0, %v888
        %v890 = vpop.f32.mrf.mxu0
        %v891 = vadd.f32 0.0, %v890
        %v892 = vpop.f32.mrf.mxu0
        %v893 = vadd.f32 0.0, %v892
        %894 = vmatprep.mubr.bf16.mxu0 0
        %895 = vmatmul.mubr.bf16.gmra.mxu0 %v811
        %v896 = vpop.f32.mrf.mxu0
        %v897 = vadd.f32 0.0, %v896
        %v898 = vpop.f32.mrf.mxu0
        %v899 = vadd.f32 0.0, %v898
        %v900 = vpop.f32.mrf.mxu0
        %v901 = vadd.f32 0.0, %v900
        %v902 = vpop.f32.mrf.mxu0
        %v903 = vadd.f32 0.0, %v902
        %904 = vmatprep.mubr.bf16.mxu0 0
        %905 = vmatmul.mubr.bf16.gmra.mxu0 %v814
        %v906 = vpop.f32.mrf.mxu0
        %v907 = vadd.f32 0.0, %v906
        %v908 = vpop.f32.mrf.mxu0
        %v909 = vadd.f32 0.0, %v908
        %v910 = vpop.f32.mrf.mxu0
        %v911 = vadd.f32 0.0, %v910
        %v912 = vpop.f32.mrf.mxu0
        %v913 = vadd.f32 0.0, %v912
        %914 = vmatprep.mubr.bf16.mxu0 0
        %915 = vmatmul.mubr.bf16.gmra.mxu0 %v817
        %v916 = vpop.f32.mrf.mxu0
        %v917 = vadd.f32 0.0, %v916
        %v918 = vpop.f32.mrf.mxu0
        %v919 = vadd.f32 0.0, %v918
        %v920 = vpop.f32.mrf.mxu0
        %v921 = vadd.f32 0.0, %v920
        %v922 = vpop.f32.mrf.mxu0
        %v923 = vadd.f32 0.0, %v922
        %924 = vmatprep.mubr.bf16.mxu0 0
        %925 = vmatmul.mubr.bf16.gmra.mxu0 %v820
        %v926 = vpop.f32.mrf.mxu0
        %v927 = vadd.f32 0.0, %v926
        %v928 = vpop.f32.mrf.mxu0
        %v929 = vadd.f32 0.0, %v928
        %v930 = vpop.f32.mrf.mxu0
        %v931 = vadd.f32 0.0, %v930
        %v932 = vpop.f32.mrf.mxu0
        %v933 = vadd.f32 0.0, %v932
        %934 = vdwg.mxu0
        %v935 = vmax.f32 %v857, %v859
        %936 = vmax.xlane.f32.xlu0 %v935
        %v937 = vpop.xlane.xlu0 %936
        %v938 = vmax.f32 %v861, %v863
        %939 = vmax.xlane.f32.xlu0 %v938
        %v940 = vpop.xlane.xlu0 %939
        %v941 = vmax.f32 %v867, %v869
        %942 = vmax.xlane.f32.xlu0 %v941
        %v943 = vpop.xlane.xlu0 %942
        %v944 = vmax.f32 %v871, %v873
        %945 = vmax.xlane.f32.xlu0 %v944
        %v946 = vpop.xlane.xlu0 %945
        %v947 = vmax.f32 %v877, %v879
        %948 = vmax.xlane.f32.xlu0 %v947
        %v949 = vpop.xlane.xlu0 %948
        %v950 = vmax.f32 %v881, %v883
        %951 = vmax.xlane.f32.xlu0 %v950
        %v952 = vpop.xlane.xlu0 %951
        %v953 = vmax.f32 %v887, %v889
        %954 = vmax.xlane.f32.xlu0 %v953
        %v955 = vpop.xlane.xlu0 %954
        %v956 = vmax.f32 %v891, %v893
        %957 = vmax.xlane.f32.xlu0 %v956
        %v958 = vpop.xlane.xlu0 %957
        %v959 = vmax.f32 %v897, %v899
        %960 = vmax.xlane.f32.xlu0 %v959
        %v961 = vpop.xlane.xlu0 %960
        %v962 = vmax.f32 %v901, %v903
        %963 = vmax.xlane.f32.xlu0 %v962
        %v964 = vpop.xlane.xlu0 %963
        %v965 = vmax.f32 %v907, %v909
        %966 = vmax.xlane.f32.xlu0 %v965
        %v967 = vpop.xlane.xlu0 %966
        %v968 = vmax.f32 %v911, %v913
        %969 = vmax.xlane.f32.xlu0 %v968
        %v970 = vpop.xlane.xlu0 %969
        %v971 = vmax.f32 %v917, %v919
        %972 = vmax.xlane.f32.xlu0 %v971
        %v973 = vpop.xlane.xlu0 %972
        %v974 = vmax.f32 %v921, %v923
        %975 = vmax.xlane.f32.xlu0 %v974
        %v976 = vpop.xlane.xlu0 %975
        %v977 = vmax.f32 %v927, %v929
        %978 = vmax.xlane.f32.xlu0 %v977
        %v979 = vpop.xlane.xlu0 %978
        %v980 = vmax.f32 %v931, %v933
        %981 = vmax.xlane.f32.xlu0 %v980
        %v982 = vpop.xlane.xlu0 %981
        %v983 = vsub.f32 %v857, %v937
        %v984 = vsub.f32 %v859, %v937
        %v985 = vsub.f32 %v861, %v940
        %v986 = vsub.f32 %v863, %v940
        %v987 = vsub.f32 %v867, %v943
        %v988 = vsub.f32 %v869, %v943
        %v989 = vsub.f32 %v871, %v946
        %v990 = vsub.f32 %v873, %v946
        %v991 = vsub.f32 %v877, %v949
        %v992 = vsub.f32 %v879, %v949
        %v993 = vsub.f32 %v881, %v952
        %v994 = vsub.f32 %v883, %v952
        %v995 = vsub.f32 %v887, %v955
        %v996 = vsub.f32 %v889, %v955
        %v997 = vsub.f32 %v891, %v958
        %v998 = vsub.f32 %v893, %v958
        %v999 = vsub.f32 %v897, %v961
        %v1000 = vsub.f32 %v899, %v961
        %v1001 = vsub.f32 %v901, %v964
        %v1002 = vsub.f32 %v903, %v964
        %v1003 = vsub.f32 %v907, %v967
        %v1004 = vsub.f32 %v909, %v967
        %v1005 = vsub.f32 %v911, %v970
        %v1006 = vsub.f32 %v913, %v970
        %v1007 = vsub.f32 %v917, %v973
        %v1008 = vsub.f32 %v919, %v973
        %v1009 = vsub.f32 %v921, %v976
        %v1010 = vsub.f32 %v923, %v976
        %v1011 = vsub.f32 %v927, %v979
        %v1012 = vsub.f32 %v929, %v979
        %v1013 = vsub.f32 %v931, %v982
        %v1014 = vsub.f32 %v933, %v982
        %v1015 = vmul.f32 %v983, 1.442695
        %v1016 = vpow.pop %v1015
        %v1017 = vmul.f32 %v984, 1.442695
        %v1018 = vpow.pop %v1017
        %v1019 = vmul.f32 %v985, 1.442695
        %v1020 = vpow.pop %v1019
        %v1021 = vmul.f32 %v986, 1.442695
        %v1022 = vpow.pop %v1021
        %v1023 = vmul.f32 %v987, 1.442695
        %v1024 = vpow.pop %v1023
        %v1025 = vmul.f32 %v988, 1.442695
        %v1026 = vpow.pop %v1025
        %v1027 = vmul.f32 %v989, 1.442695
        %v1028 = vpow.pop %v1027
        %v1029 = vmul.f32 %v990, 1.442695
        %v1030 = vpow.pop %v1029
        %v1031 = vmul.f32 %v991, 1.442695
        %v1032 = vpow.pop %v1031
        %v1033 = vmul.f32 %v992, 1.442695
        %v1034 = vpow.pop %v1033
        %v1035 = vmul.f32 %v993, 1.442695
        %v1036 = vpow.pop %v1035
        %v1037 = vmul.f32 %v994, 1.442695
        %v1038 = vpow.pop %v1037
        %v1039 = vmul.f32 %v995, 1.442695
        %v1040 = vpow.pop %v1039
        %v1041 = vmul.f32 %v996, 1.442695
        %v1042 = vpow.pop %v1041
        %v1043 = vmul.f32 %v997, 1.442695
        %v1044 = vpow.pop %v1043
        %v1045 = vmul.f32 %v998, 1.442695
        %v1046 = vpow.pop %v1045
        %v1047 = vmul.f32 %v999, 1.442695
        %v1048 = vpow.pop %v1047
        %v1049 = vmul.f32 %v1000, 1.442695
        %v1050 = vpow.pop %v1049
        %v1051 = vmul.f32 %v1001, 1.442695
        %v1052 = vpow.pop %v1051
        %v1053 = vmul.f32 %v1002, 1.442695
        %v1054 = vpow.pop %v1053
        %v1055 = vmul.f32 %v1003, 1.442695
        %v1056 = vpow.pop %v1055
        %v1057 = vmul.f32 %v1004, 1.442695
        %v1058 = vpow.pop %v1057
        %v1059 = vmul.f32 %v1005, 1.442695
        %v1060 = vpow.pop %v1059
        %v1061 = vmul.f32 %v1006, 1.442695
        %v1062 = vpow.pop %v1061
        %v1063 = vmul.f32 %v1007, 1.442695
        %v1064 = vpow.pop %v1063
        %v1065 = vmul.f32 %v1008, 1.442695
        %v1066 = vpow.pop %v1065
        %v1067 = vmul.f32 %v1009, 1.442695
        %v1068 = vpow.pop %v1067
        %v1069 = vmul.f32 %v1010, 1.442695
        %v1070 = vpow.pop %v1069
        %v1071 = vmul.f32 %v1011, 1.442695
        %v1072 = vpow.pop %v1071
        %v1073 = vmul.f32 %v1012, 1.442695
        %v1074 = vpow.pop %v1073
        %v1075 = vmul.f32 %v1013, 1.442695
        %v1076 = vpow.pop %v1075
        %v1077 = vmul.f32 %v1014, 1.442695
        %v1078 = vpow.pop %v1077
        %v1079 = vadd.f32 %v1016, %v1018
        %1080 = vadd.xlane.f32.xlu0 %v1079
        %v1081 = vpop.xlane.xlu0 %1080
        %v1082 = vadd.f32 %v1020, %v1022
        %1083 = vadd.xlane.f32.xlu0 %v1082
        %v1084 = vpop.xlane.xlu0 %1083
        %v1085 = vadd.f32 %v1024, %v1026
        %1086 = vadd.xlane.f32.xlu0 %v1085
        %v1087 = vpop.xlane.xlu0 %1086
        %v1088 = vadd.f32 %v1028, %v1030
        %1089 = vadd.xlane.f32.xlu0 %v1088
        %v1090 = vpop.xlane.xlu0 %1089
        %v1091 = vadd.f32 %v1032, %v1034
        %1092 = vadd.xlane.f32.xlu0 %v1091
        %v1093 = vpop.xlane.xlu0 %1092
        %v1094 = vadd.f32 %v1036, %v1038
        %1095 = vadd.xlane.f32.xlu0 %v1094
        %v1096 = vpop.xlane.xlu0 %1095
        %v1097 = vadd.f32 %v1040, %v1042
        %1098 = vadd.xlane.f32.xlu0 %v1097
        %v1099 = vpop.xlane.xlu0 %1098
        %v1100 = vadd.f32 %v1044, %v1046
        %1101 = vadd.xlane.f32.xlu0 %v1100
        %v1102 = vpop.xlane.xlu0 %1101
        %v1103 = vadd.f32 %v1048, %v1050
        %1104 = vadd.xlane.f32.xlu0 %v1103
        %v1105 = vpop.xlane.xlu0 %1104
        %v1106 = vadd.f32 %v1052, %v1054
        %1107 = vadd.xlane.f32.xlu0 %v1106
        %v1108 = vpop.xlane.xlu0 %1107
        %v1109 = vadd.f32 %v1056, %v1058
        %1110 = vadd.xlane.f32.xlu0 %v1109
        %v1111 = vpop.xlane.xlu0 %1110
        %v1112 = vadd.f32 %v1060, %v1062
        %1113 = vadd.xlane.f32.xlu0 %v1112
        %v1114 = vpop.xlane.xlu0 %1113
        %v1115 = vadd.f32 %v1064, %v1066
        %1116 = vadd.xlane.f32.xlu0 %v1115
        %v1117 = vpop.xlane.xlu0 %1116
        %v1118 = vadd.f32 %v1068, %v1070
        %1119 = vadd.xlane.f32.xlu0 %v1118
        %v1120 = vpop.xlane.xlu0 %1119
        %v1121 = vadd.f32 %v1072, %v1074
        %1122 = vadd.xlane.f32.xlu0 %v1121
        %v1123 = vpop.xlane.xlu0 %1122
        %v1124 = vadd.f32 %v1076, %v1078
        %1125 = vadd.xlane.f32.xlu0 %v1124
        %v1126 = vpop.xlane.xlu0 %1125
        %v1127 = vrcp.pop %v1081
        %v1128 = vrcp.pop %v1084
        %v1129 = vrcp.pop %v1087
        %v1130 = vrcp.pop %v1090
        %v1131 = vrcp.pop %v1093
        %v1132 = vrcp.pop %v1096
        %v1133 = vrcp.pop %v1099
        %v1134 = vrcp.pop %v1102
        %v1135 = vrcp.pop %v1105
        %v1136 = vrcp.pop %v1108
        %v1137 = vrcp.pop %v1111
        %v1138 = vrcp.pop %v1114
        %v1139 = vrcp.pop %v1117
        %v1140 = vrcp.pop %v1120
        %v1141 = vrcp.pop %v1123
        %v1142 = vrcp.pop %v1126
        %v1143 = vmul.f32 %v1016, %v1127
        %v1144 = vmul.f32 %v1018, %v1127
        %v1145 = vmul.f32 %v1020, %v1128
        %v1146 = vmul.f32 %v1022, %v1128
        %v1147 = vmul.f32 %v1024, %v1129
        %v1148 = vmul.f32 %v1026, %v1129
        %v1149 = vmul.f32 %v1028, %v1130
        %v1150 = vmul.f32 %v1030, %v1130
        %v1151 = vmul.f32 %v1032, %v1131
        %v1152 = vmul.f32 %v1034, %v1131
        %v1153 = vmul.f32 %v1036, %v1132
        %v1154 = vmul.f32 %v1038, %v1132
        %v1155 = vmul.f32 %v1040, %v1133
        %v1156 = vmul.f32 %v1042, %v1133
        %v1157 = vmul.f32 %v1044, %v1134
        %v1158 = vmul.f32 %v1046, %v1134
        %v1159 = vmul.f32 %v1048, %v1135
        %v1160 = vmul.f32 %v1050, %v1135
        %v1161 = vmul.f32 %v1052, %v1136
        %v1162 = vmul.f32 %v1054, %v1136
        %v1163 = vmul.f32 %v1056, %v1137
        %v1164 = vmul.f32 %v1058, %v1137
        %v1165 = vmul.f32 %v1060, %v1138
        %v1166 = vmul.f32 %v1062, %v1138
        %v1167 = vmul.f32 %v1064, %v1139
        %v1168 = vmul.f32 %v1066, %v1139
        %v1169 = vmul.f32 %v1068, %v1140
        %v1170 = vmul.f32 %v1070, %v1140
        %v1171 = vmul.f32 %v1072, %v1141
        %v1172 = vmul.f32 %v1074, %v1141
        %v1173 = vmul.f32 %v1076, %v1142
        %v1174 = vmul.f32 %v1078, %v1142
        %v1175 = vld [vmem:[#allocation4] sm:$0x3]
        %v1176 = vadd.f32 %v1143, %v1145
        %v1177 = vadd.f32 %v1176, %v1147
        %v1178 = vadd.f32 %v1177, %v1149
        %v1179 = vadd.f32 %v1178, %v1151
        %v1180 = vadd.f32 %v1179, %v1153
        %v1181 = vadd.f32 %v1180, %v1155
        %v1182 = vadd.f32 %v1181, %v1157
        %v1183 = vadd.f32 %v1182, %v1159
        %v1184 = vadd.f32 %v1183, %v1161
        %v1185 = vadd.f32 %v1184, %v1163
        %v1186 = vadd.f32 %v1185, %v1165
        %v1187 = vadd.f32 %v1186, %v1167
        %v1188 = vadd.f32 %v1187, %v1169
        %v1189 = vadd.f32 %v1188, %v1171
        %v1190 = vadd.f32 %v1189, %v1173
        %v1191 = vrot.slane %v1190, 4
        %v1192 = vadd.f32 %v1190, %v1191
        %v1193 = vrot.slane %v1192, 2
        %v1194 = vadd.f32 %v1192, %v1193
        %v1195 = vrot.slane %v1194, 1
        %v1196 = vadd.f32 %v1194, %v1195
        %v1197 = vadd.f32 %v1144, %v1146
        %v1198 = vadd.f32 %v1197, %v1148
        %v1199 = vadd.f32 %v1198, %v1150
        %v1200 = vadd.f32 %v1199, %v1152
        %v1201 = vadd.f32 %v1200, %v1154
        %v1202 = vadd.f32 %v1201, %v1156
        %v1203 = vadd.f32 %v1202, %v1158
        %v1204 = vadd.f32 %v1203, %v1160
        %v1205 = vadd.f32 %v1204, %v1162
        %v1206 = vadd.f32 %v1205, %v1164
        %v1207 = vadd.f32 %v1206, %v1166
        %v1208 = vadd.f32 %v1207, %v1168
        %v1209 = vadd.f32 %v1208, %v1170
        %v1210 = vadd.f32 %v1209, %v1172
        %v1211 = vadd.f32 %v1210, %v1174
        %v1212 = vrot.slane %v1211, 4
        %v1213 = vadd.f32 %v1211, %v1212
        %v1214 = vrot.slane %v1213, 2
        %v1215 = vadd.f32 %v1213, %v1214
        %v1216 = vrot.slane %v1215, 1
        %v1217 = vadd.f32 %v1215, %v1216
        %v1220 = vcombine.low %v1196, %v1217
        %v1222 = vunpack.c.l.s4 1966171168
        %v1223 = vunpack.c.0.s8 %v1222
        %v1224 = vlaneseq
        %v1225 = vshrl.u32 %v1224, 7
        %v1226 = vsub.s32 %v1223, %v1225
        %v1227 = vrot.slane %v1220, %v1226
        %v1229 = vunpack.c.l.s4 1966171168
        %v1230 = vunpack.c.0.s8 %v1229
        %v1231 = vlaneseq
        %v1232 = vshrl.u32 %v1231, 7
        %v1233 = vsub.s32 %v1230, %v1232
        %v1234 = vrot.slane %v1227, %v1233
        %v1236 = vadd.f32 %v1175, %v1234
        %v1237 = vlaneseq
        %vm1238 = vcmp.ge.s32.totalorder %v1237, 0
        %vm1239 = vcmp.lt.s32.totalorder %v1237, 256
        %vm1240 = vmand %vm1238, %vm1239
        %1241 = vst.msk [vmem:[#allocation4] sm:$0x3] %vm1240, %v1236
        %v1242 = vld [vmem:[#allocation3] sm:$0xff]
        %v1243 = vld [vmem:[#allocation3 + $0x8] sm:$0xff]
        %v1244 = vld [vmem:[#allocation3 + $0x10] sm:$0xff]
        %v1245 = vld [vmem:[#allocation3 + $0x18] sm:$0xff]
        %v1246 = vld [vmem:[#allocation3 + $0x20] sm:$0xff]
        %v1247 = vld [vmem:[#allocation3 + $0x28] sm:$0xff]
        %v1248 = vld [vmem:[#allocation3 + $0x30] sm:$0xff]
        %v1249 = vld [vmem:[#allocation3 + $0x38] sm:$0xff]
        %v1250 = vld [vmem:[#allocation3 + $0x40] sm:$0xff]
        %v1251 = vld [vmem:[#allocation3 + $0x48] sm:$0xff]
        %v1252 = vld [vmem:[#allocation3 + $0x50] sm:$0xff]
        %v1253 = vld [vmem:[#allocation3 + $0x58] sm:$0xff]
        %v1254 = vld [vmem:[#allocation3 + $0x60] sm:$0xff]
        %v1255 = vld [vmem:[#allocation3 + $0x68] sm:$0xff]
        %v1256 = vld [vmem:[#allocation3 + $0x70] sm:$0xff]
        %v1257 = vld [vmem:[#allocation3 + $0x78] sm:$0xff]
        %v1258 = vpack.c.bf16 %v741, %v738
        %v1259 = vpack.c.bf16 %v749, %v746
        %v1260 = vpack.c.bf16 %v757, %v754
        %v1261 = vpack.c.bf16 %v765, %v762
        %v1262 = vpack.c.bf16 %v1145, %v1143
        %v1263 = vpack.c.bf16 %v1146, %v1144
        %v1264 = vpack.c.bf16 %v1149, %v1147
        %v1265 = vpack.c.bf16 %v1150, %v1148
        %v1266 = vpack.c.bf16 %v1153, %v1151
        %v1267 = vpack.c.bf16 %v1154, %v1152
        %v1268 = vpack.c.bf16 %v1157, %v1155
        %v1269 = vpack.c.bf16 %v1158, %v1156
        %v1270 = vpack.c.bf16 %v1161, %v1159
        %v1271 = vpack.c.bf16 %v1162, %v1160
        %v1272 = vpack.c.bf16 %v1165, %v1163
        %v1273 = vpack.c.bf16 %v1166, %v1164
        %v1274 = vpack.c.bf16 %v1169, %v1167
        %v1275 = vpack.c.bf16 %v1170, %v1168
        %v1276 = vpack.c.bf16 %v1173, %v1171
        %v1277 = vpack.c.bf16 %v1174, %v1172
        %1278 = vmatprep.subr.bf16.mxu0 %v1277
        %1279 = vmatpush1.bf16.msra.mxu0 %v1276
        %1280 = vmatprep.subr.bf16.mxu0 %v1275
        %1281 = vmatpush1.bf16.msra.mxu0 %v1274
        %1282 = vmatprep.subr.bf16.mxu0 %v1273
        %1283 = vmatpush1.bf16.msra.mxu0 %v1272
        %1284 = vmatprep.subr.bf16.mxu0 %v1271
        %1285 = vmatpush1.bf16.msra.mxu0 %v1270
        %1286 = vmatprep.subr.bf16.mxu0 %v1269
        %1287 = vmatpush1.bf16.msra.mxu0 %v1268
        %1288 = vmatprep.subr.bf16.mxu0 %v1267
        %1289 = vmatpush1.bf16.msra.mxu0 %v1266
        %1290 = vmatprep.subr.bf16.mxu0 %v1265
        %1291 = vmatpush1.bf16.msra.mxu0 %v1264
        %1292 = vmatprep.subr.bf16.mxu0 %v1263
        %1293 = vmatpush1.bf16.msra.mxu0 %v1262
        %1294 = vmatprep.subr.bf16.mxu0 0
        %1295 = vmatpush2.bf16.msra.mxu0 0
        %1296 = vmatprep.subr.bf16.mxu0 0
        %1297 = vmatpush2.bf16.msra.mxu0 0
        %1298 = vmatprep.subr.bf16.mxu0 0
        %1299 = vmatpush2.bf16.msra.mxu0 0
        %1300 = vmatprep.subr.bf16.mxu0 0
        %1301 = vmatpush2.bf16.msra.mxu0 0
        %1302 = vmatprep.subr.bf16.mxu0 0
        %1303 = vmatpush2.bf16.msra.mxu0 0
        %1304 = vmatprep.subr.bf16.mxu0 0
        %1305 = vmatpush2.bf16.msra.mxu0 0
        %1306 = vmatprep.subr.bf16.mxu0 0
        %1307 = vmatpush2.bf16.msra.mxu0 0
        %1308 = vmatprep.subr.bf16.mxu0 0
        %1309 = vmatpush2.bf16.msra.mxu0 0
        %1310 = vmatprep.mubr.bf16.mxu0 0
        %1311 = vmatmul.mubr.bf16.gmra.mxu0 %v1258
        %v1312 = vpop.f32.mrf.mxu0
        %v1313 = vadd.f32 0.0, %v1312
        %v1314 = vpop.f32.mrf.mxu0
        %v1315 = vadd.f32 0.0, %v1314
        %v1316 = vpop.f32.mrf.mxu0
        %v1317 = vadd.f32 0.0, %v1316
        %v1318 = vpop.f32.mrf.mxu0
        %v1319 = vadd.f32 0.0, %v1318
        %1320 = vmatprep.mubr.bf16.mxu0 0
        %1321 = vmatmul.mubr.bf16.gmra.mxu0 %v1259
        %v1322 = vpop.f32.mrf.mxu0
        %v1323 = vadd.f32 0.0, %v1322
        %v1324 = vpop.f32.mrf.mxu0
        %v1325 = vadd.f32 0.0, %v1324
        %v1326 = vpop.f32.mrf.mxu0
        %v1327 = vadd.f32 0.0, %v1326
        %v1328 = vpop.f32.mrf.mxu0
        %v1329 = vadd.f32 0.0, %v1328
        %1330 = vmatprep.mubr.bf16.mxu0 0
        %1331 = vmatmul.mubr.bf16.gmra.mxu0 %v1260
        %v1332 = vpop.f32.mrf.mxu0
        %v1333 = vadd.f32 0.0, %v1332
        %v1334 = vpop.f32.mrf.mxu0
        %v1335 = vadd.f32 0.0, %v1334
        %v1336 = vpop.f32.mrf.mxu0
        %v1337 = vadd.f32 0.0, %v1336
        %v1338 = vpop.f32.mrf.mxu0
        %v1339 = vadd.f32 0.0, %v1338
        %1340 = vmatprep.mubr.bf16.mxu0 0
        %1341 = vmatmul.mubr.bf16.gmra.mxu0 %v1261
        %v1342 = vpop.f32.mrf.mxu0
        %v1343 = vadd.f32 0.0, %v1342
        %v1344 = vpop.f32.mrf.mxu0
        %v1345 = vadd.f32 0.0, %v1344
        %v1346 = vpop.f32.mrf.mxu0
        %v1347 = vadd.f32 0.0, %v1346
        %v1348 = vpop.f32.mrf.mxu0
        %v1349 = vadd.f32 0.0, %v1348
        %1350 = vdwg.mxu0
        %v1351 = vadd.f32 %v1242, %v1313
        %v1352 = vadd.f32 %v1243, %v1315
        %v1353 = vadd.f32 %v1244, %v1317
        %v1354 = vadd.f32 %v1245, %v1319
        %v1355 = vadd.f32 %v1246, %v1323
        %v1356 = vadd.f32 %v1247, %v1325
        %v1357 = vadd.f32 %v1248, %v1327
        %v1358 = vadd.f32 %v1249, %v1329
        %v1359 = vadd.f32 %v1250, %v1333
        %v1360 = vadd.f32 %v1251, %v1335
        %v1361 = vadd.f32 %v1252, %v1337
        %v1362 = vadd.f32 %v1253, %v1339
        %v1363 = vadd.f32 %v1254, %v1343
        %v1364 = vadd.f32 %v1255, %v1345
        %v1365 = vadd.f32 %v1256, %v1347
        %v1366 = vadd.f32 %v1257, %v1349
        %1367 = vst [vmem:[#allocation3] sm:$0xff] %v1351
        %1368 = vst [vmem:[#allocation3 + $0x8] sm:$0xff] %v1352
        %1369 = vst [vmem:[#allocation3 + $0x10] sm:$0xff] %v1353
        %1370 = vst [vmem:[#allocation3 + $0x18] sm:$0xff] %v1354
        %1371 = vst [vmem:[#allocation3 + $0x20] sm:$0xff] %v1355
        %1372 = vst [vmem:[#allocation3 + $0x28] sm:$0xff] %v1356
        %1373 = vst [vmem:[#allocation3 + $0x30] sm:$0xff] %v1357
        %1374 = vst [vmem:[#allocation3 + $0x38] sm:$0xff] %v1358
        %1375 = vst [vmem:[#allocation3 + $0x40] sm:$0xff] %v1359
        %1376 = vst [vmem:[#allocation3 + $0x48] sm:$0xff] %v1360
        %1377 = vst [vmem:[#allocation3 + $0x50] sm:$0xff] %v1361
        %1378 = vst [vmem:[#allocation3 + $0x58] sm:$0xff] %v1362
        %1379 = vst [vmem:[#allocation3 + $0x60] sm:$0xff] %v1363
        %1380 = vst [vmem:[#allocation3 + $0x68] sm:$0xff] %v1364
        %1381 = vst [vmem:[#allocation3 + $0x70] sm:$0xff] %v1365
        %1382 = vst [vmem:[#allocation3 + $0x78] sm:$0xff] %v1366
        %p1383 = scmp.eq.s32.totalorder %s32, 1
        // Predicated region
        $region61: #{sa_layer.2} parent=47 // pred_check
          %p1384 = pneg %p1383
        $region62: #{sa_layer.2} parent=47 // pred_check_branch
          %1386 = sbr.rel (%p1384) target = $region64
        $region63: #{sa_layer.2} parent=47 // pred_region
          %v1387 = vld [vmem:[#allocation3] sm:$0xff]
          %v1388 = vld [vmem:[#allocation3 + $0x8] sm:$0xff]
          %v1389 = vld [vmem:[#allocation3 + $0x10] sm:$0xff]
          %v1390 = vld [vmem:[#allocation3 + $0x18] sm:$0xff]
          %v1391 = vld [vmem:[#allocation3 + $0x20] sm:$0xff]
          %v1392 = vld [vmem:[#allocation3 + $0x28] sm:$0xff]
          %v1393 = vld [vmem:[#allocation3 + $0x30] sm:$0xff]
          %v1394 = vld [vmem:[#allocation3 + $0x38] sm:$0xff]
          %v1395 = vld [vmem:[#allocation3 + $0x40] sm:$0xff]
          %v1396 = vld [vmem:[#allocation3 + $0x48] sm:$0xff]
          %v1397 = vld [vmem:[#allocation3 + $0x50] sm:$0xff]
          %v1398 = vld [vmem:[#allocation3 + $0x58] sm:$0xff]
          %v1399 = vld [vmem:[#allocation3 + $0x60] sm:$0xff]
          %v1400 = vld [vmem:[#allocation3 + $0x68] sm:$0xff]
          %v1401 = vld [vmem:[#allocation3 + $0x70] sm:$0xff]
          %v1402 = vld [vmem:[#allocation3 + $0x78] sm:$0xff]
          %v1403 = vld [vmem:[#allocation4] sm:$0x3]
          %v1404 = vadd.f32 %v1403, 1e-09
          %v1405 = vrcp.pop %v1404
          %v1407 = vlaneseq
          %v1408 = vshrl.u32 %v1407, 7
          %v1409 = vsub.s32 0, %v1408
          %v1410 = vrot.slane %v1405, %v1409
          %v1411 = vlaneseq
          %v1412 = vshrl.u32 %v1411, 7
          %v1413 = vsub.s32 1, %v1412
          %v1414 = vrot.slane %v1405, %v1413
          %v1417 = vmul.f32 %v1387, %v1410
          %v1418 = vmul.f32 %v1388, %v1414
          %v1419 = vmul.f32 %v1389, %v1410
          %v1420 = vmul.f32 %v1390, %v1414
          %v1421 = vmul.f32 %v1391, %v1410
          %v1422 = vmul.f32 %v1392, %v1414
          %v1423 = vmul.f32 %v1393, %v1410
          %v1424 = vmul.f32 %v1394, %v1414
          %v1425 = vmul.f32 %v1395, %v1410
          %v1426 = vmul.f32 %v1396, %v1414
          %v1427 = vmul.f32 %v1397, %v1410
          %v1428 = vmul.f32 %v1398, %v1414
          %v1429 = vmul.f32 %v1399, %v1410
          %v1430 = vmul.f32 %v1400, %v1414
          %v1431 = vmul.f32 %v1401, %v1410
          %v1432 = vmul.f32 %v1402, %v1414
          %v1433 = vld [vmem:[%s359] sm:$0xff]
          %v1434 = vld [vmem:[%s359 + $0x8] sm:$0xff]
          %v1435 = vld [vmem:[%s359 + $0x10] sm:$0xff]
          %v1436 = vld [vmem:[%s359 + $0x18] sm:$0xff]
          %v1437 = vld [vmem:[%s359 + $0x20] sm:$0xff]
          %v1438 = vld [vmem:[%s359 + $0x28] sm:$0xff]
          %v1439 = vld [vmem:[%s359 + $0x30] sm:$0xff]
          %v1440 = vld [vmem:[%s359 + $0x38] sm:$0xff]
          %v1441 = vld [vmem:[%s359 + $0x40] sm:$0xff]
          %v1442 = vld [vmem:[%s359 + $0x48] sm:$0xff]
          %v1443 = vld [vmem:[%s359 + $0x50] sm:$0xff]
          %v1444 = vld [vmem:[%s359 + $0x58] sm:$0xff]
          %v1445 = vld [vmem:[%s359 + $0x60] sm:$0xff]
          %v1446 = vld [vmem:[%s359 + $0x68] sm:$0xff]
          %v1447 = vld [vmem:[%s359 + $0x70] sm:$0xff]
          %v1448 = vld [vmem:[%s359 + $0x78] sm:$0xff]
          %v1449 = vsub.f32 %v1433, %v1417
          %v1450 = vsub.f32 %v1434, %v1418
          %v1451 = vsub.f32 %v1435, %v1419
          %v1452 = vsub.f32 %v1436, %v1420
          %v1453 = vsub.f32 %v1437, %v1421
          %v1454 = vsub.f32 %v1438, %v1422
          %v1455 = vsub.f32 %v1439, %v1423
          %v1456 = vsub.f32 %v1440, %v1424
          %v1457 = vsub.f32 %v1441, %v1425
          %v1458 = vsub.f32 %v1442, %v1426
          %v1459 = vsub.f32 %v1443, %v1427
          %v1460 = vsub.f32 %v1444, %v1428
          %v1461 = vsub.f32 %v1445, %v1429
          %v1462 = vsub.f32 %v1446, %v1430
          %v1463 = vsub.f32 %v1447, %v1431
          %v1464 = vsub.f32 %v1448, %v1432
          %v1465 = vpack.c.bf16 %v1451, %v1449
          %v1466 = vpack.c.bf16 %v1452, %v1450
          %v1467 = vpack.c.bf16 %v1455, %v1453
          %v1468 = vpack.c.bf16 %v1456, %v1454
          %v1469 = vpack.c.bf16 %v1459, %v1457
          %v1470 = vpack.c.bf16 %v1460, %v1458
          %v1471 = vpack.c.bf16 %v1463, %v1461
          %v1472 = vpack.c.bf16 %v1464, %v1462
          %v1473 = vld [vmem:[%s5] sm:$0xf]
          %v1474 = vld [vmem:[%s5 + $0x4] sm:$0xf]
          %v1475 = vld [vmem:[%s5 + $0x8] sm:$0xf]
          %v1476 = vld [vmem:[%s5 + $0xc] sm:$0xf]
          %v1477 = vld [vmem:[%s5 + $0x10] sm:$0xf]
          %v1478 = vld [vmem:[%s5 + $0x14] sm:$0xf]
          %v1479 = vld [vmem:[%s5 + $0x18] sm:$0xf]
          %v1480 = vld [vmem:[%s5 + $0x1c] sm:$0xf]
          %v1481 = vld [vmem:[%s6] sm:$0xff]
          %v1482 = vld [vmem:[%s6 + $0x8] sm:$0xff]
          %v1483 = vld [vmem:[%s6 + $0x10] sm:$0xff]
          %v1484 = vld [vmem:[%s6 + $0x18] sm:$0xff]
          %v1485 = vld [vmem:[%s6 + $0x20] sm:$0xff]
          %v1486 = vld [vmem:[%s6 + $0x28] sm:$0xff]
          %v1487 = vld [vmem:[%s6 + $0x30] sm:$0xff]
          %v1488 = vld [vmem:[%s6 + $0x38] sm:$0xff]
          %1490 = vset.pattern.permute.xlu0 0
          %1491 = vperm.xlu0 %1490, %v1481
          %v1492 = vpop.permute.xlu0 %1491
          %1495 = vset.pattern.permute.xlu0 0
          %1496 = vperm.xlu0 %1495, %v1482
          %v1497 = vpop.permute.xlu0 %1496
          %1500 = vset.pattern.permute.xlu0 0
          %1501 = vperm.xlu0 %1500, %v1483
          %v1502 = vpop.permute.xlu0 %1501
          %1505 = vset.pattern.permute.xlu0 0
          %1506 = vperm.xlu0 %1505, %v1484
          %v1507 = vpop.permute.xlu0 %1506
          %1510 = vset.pattern.permute.xlu0 0
          %1511 = vperm.xlu0 %1510, %v1485
          %v1512 = vpop.permute.xlu0 %1511
          %1515 = vset.pattern.permute.xlu0 0
          %1516 = vperm.xlu0 %1515, %v1486
          %v1517 = vpop.permute.xlu0 %1516
          %1520 = vset.pattern.permute.xlu0 0
          %1521 = vperm.xlu0 %1520, %v1487
          %v1522 = vpop.permute.xlu0 %1521
          %1525 = vset.pattern.permute.xlu0 0
          %1526 = vperm.xlu0 %1525, %v1488
          %v1527 = vpop.permute.xlu0 %1526
          %v1537 = vunpack.c.l.b16 %v1473
          %v1538 = vunpack.c.l.b16 %v1474
          %v1539 = vunpack.c.l.b16 %v1475
          %v1540 = vunpack.c.l.b16 %v1476
          %v1541 = vunpack.c.l.b16 %v1477
          %v1542 = vunpack.c.l.b16 %v1478
          %v1543 = vunpack.c.l.b16 %v1479
          %v1544 = vunpack.c.l.b16 %v1480
          %v1545 = vpack.c.b16 %v1538, %v1537
          %v1546 = vpack.c.b16 %v1540, %v1539
          %v1547 = vpack.c.b16 %v1542, %v1541
          %v1548 = vpack.c.b16 %v1544, %v1543
          %v1550 = vsel %vm570, %v1545, 0
          %v1553 = vsel %vm570, %v1546, 0
          %v1556 = vsel %vm570, %v1547, 0
          %v1559 = vsel %vm570, %v1548, 0
          %1561 = vmatprep.subr.bf16.mxu0 0
          %1562 = vmatpush1.bf16.msra.mxu0 0
          %1563 = vmatprep.subr.bf16.mxu0 0
          %1564 = vmatpush1.bf16.msra.mxu0 0
          %1565 = vmatprep.subr.bf16.mxu0 0
          %1566 = vmatpush1.bf16.msra.mxu0 0
          %1567 = vmatprep.subr.bf16.mxu0 0
          %1568 = vmatpush1.bf16.msra.mxu0 0
          %1569 = vmatprep.subr.bf16.mxu0 %v1472
          %1570 = vmatpush1.bf16.msra.mxu0 %v1471
          %1571 = vmatprep.subr.bf16.mxu0 %v1470
          %1572 = vmatpush1.bf16.msra.mxu0 %v1469
          %1573 = vmatprep.subr.bf16.mxu0 %v1468
          %1574 = vmatpush1.bf16.msra.mxu0 %v1467
          %1575 = vmatprep.subr.bf16.mxu0 %v1466
          %1576 = vmatpush1.bf16.msra.mxu0 %v1465
          %1577 = vmatprep.subr.bf16.mxu0 0
          %1578 = vmatpush2.bf16.msra.mxu0 0
          %1579 = vmatprep.subr.bf16.mxu0 0
          %1580 = vmatpush2.bf16.msra.mxu0 0
          %1581 = vmatprep.subr.bf16.mxu0 0
          %1582 = vmatpush2.bf16.msra.mxu0 0
          %1583 = vmatprep.subr.bf16.mxu0 0
          %1584 = vmatpush2.bf16.msra.mxu0 0
          %1585 = vmatprep.subr.bf16.mxu0 0
          %1586 = vmatpush2.bf16.msra.mxu0 0
          %1587 = vmatprep.subr.bf16.mxu0 0
          %1588 = vmatpush2.bf16.msra.mxu0 0
          %1589 = vmatprep.subr.bf16.mxu0 0
          %1590 = vmatpush2.bf16.msra.mxu0 0
          %1591 = vmatprep.subr.bf16.mxu0 0
          %1592 = vmatpush2.bf16.msra.mxu0 0
          %1593 = vmatprep.mubr.bf16.mxu0 0
          %1594 = vmatmul.mubr.bf16.gmra.mxu0 %v1550
          %v1595 = vpop.f32.mrf.mxu0
          %v1596 = vadd.f32 %v1492, %v1595
          %v1597 = vpop.f32.mrf.mxu0
          %v1598 = vadd.f32 %v1492, %v1597
          %v1599 = vpop.f32.mrf.mxu0
          %v1600 = vadd.f32 %v1497, %v1599
          %v1601 = vpop.f32.mrf.mxu0
          %v1602 = vadd.f32 %v1497, %v1601
          %1603 = vmatprep.mubr.bf16.mxu0 0
          %1604 = vmatmul.mubr.bf16.gmra.mxu0 %v1553
          %v1605 = vpop.f32.mrf.mxu0
          %v1606 = vadd.f32 %v1502, %v1605
          %v1607 = vpop.f32.mrf.mxu0
          %v1608 = vadd.f32 %v1502, %v1607
          %v1609 = vpop.f32.mrf.mxu0
          %v1610 = vadd.f32 %v1507, %v1609
          %v1611 = vpop.f32.mrf.mxu0
          %v1612 = vadd.f32 %v1507, %v1611
          %1613 = vmatprep.mubr.bf16.mxu0 0
          %1614 = vmatmul.mubr.bf16.gmra.mxu0 %v1556
          %v1615 = vpop.f32.mrf.mxu0
          %v1616 = vadd.f32 %v1512, %v1615
          %v1617 = vpop.f32.mrf.mxu0
          %v1618 = vadd.f32 %v1512, %v1617
          %v1619 = vpop.f32.mrf.mxu0
          %v1620 = vadd.f32 %v1517, %v1619
          %v1621 = vpop.f32.mrf.mxu0
          %v1622 = vadd.f32 %v1517, %v1621
          %1623 = vmatprep.mubr.bf16.mxu0 0
          %1624 = vmatmul.mubr.bf16.gmra.mxu0 %v1559
          %v1625 = vpop.f32.mrf.mxu0
          %v1626 = vadd.f32 %v1522, %v1625
          %v1627 = vpop.f32.mrf.mxu0
          %v1628 = vadd.f32 %v1522, %v1627
          %v1629 = vpop.f32.mrf.mxu0
          %v1630 = vadd.f32 %v1527, %v1629
          %v1631 = vpop.f32.mrf.mxu0
          %v1632 = vadd.f32 %v1527, %v1631
          %1633 = vdwg.mxu0
          %1634 = vst [vmem:[%s422] sm:$0xff] %v1596
          %1635 = vst [vmem:[%s422 + $0x8] sm:$0xff] %v1598
          %1636 = vst [vmem:[%s422 + $0x10] sm:$0xff] %v1600
          %1637 = vst [vmem:[%s422 + $0x18] sm:$0xff] %v1602
          %1638 = vst [vmem:[%s422 + $0x20] sm:$0xff] %v1606
          %1639 = vst [vmem:[%s422 + $0x28] sm:$0xff] %v1608
          %1640 = vst [vmem:[%s422 + $0x30] sm:$0xff] %v1610
          %1641 = vst [vmem:[%s422 + $0x38] sm:$0xff] %v1612
          %1642 = vst [vmem:[%s422 + $0x40] sm:$0xff] %v1616
          %1643 = vst [vmem:[%s422 + $0x48] sm:$0xff] %v1618
          %1644 = vst [vmem:[%s422 + $0x50] sm:$0xff] %v1620
          %1645 = vst [vmem:[%s422 + $0x58] sm:$0xff] %v1622
          %1646 = vst [vmem:[%s422 + $0x60] sm:$0xff] %v1626
          %1647 = vst [vmem:[%s422 + $0x68] sm:$0xff] %v1628
          %1648 = vst [vmem:[%s422 + $0x70] sm:$0xff] %v1630
          %1649 = vst [vmem:[%s422 + $0x78] sm:$0xff] %v1632
          %v1650 = vadd.f32 %v1596, %v1598
          %1651 = vadd.xlane.f32.xlu0 %v1650
          %v1652 = vpop.xlane.xlu0 %1651
          %v1653 = vadd.f32 %v1600, %v1602
          %1654 = vadd.xlane.f32.xlu0 %v1653
          %v1655 = vpop.xlane.xlu0 %1654
          %v1656 = vadd.f32 %v1606, %v1608
          %1657 = vadd.xlane.f32.xlu0 %v1656
          %v1658 = vpop.xlane.xlu0 %1657
          %v1659 = vadd.f32 %v1610, %v1612
          %1660 = vadd.xlane.f32.xlu0 %v1659
          %v1661 = vpop.xlane.xlu0 %1660
          %v1662 = vadd.f32 %v1616, %v1618
          %1663 = vadd.xlane.f32.xlu0 %v1662
          %v1664 = vpop.xlane.xlu0 %1663
          %v1665 = vadd.f32 %v1620, %v1622
          %1666 = vadd.xlane.f32.xlu0 %v1665
          %v1667 = vpop.xlane.xlu0 %1666
          %v1668 = vadd.f32 %v1626, %v1628
          %1669 = vadd.xlane.f32.xlu0 %v1668
          %v1670 = vpop.xlane.xlu0 %1669
          %v1671 = vadd.f32 %v1630, %v1632
          %1672 = vadd.xlane.f32.xlu0 %v1671
          %v1673 = vpop.xlane.xlu0 %1672
          %vm1674 = vcmask 7168
          %1675 = vst.msk [vmem:[%s427] sm:$0xff] %vm1674, %v1652
          %1676 = vst.msk [vmem:[%s427 + $0x8] sm:$0xff] %vm1674, %v1655
          %1677 = vst.msk [vmem:[%s427 + $0x10] sm:$0xff] %vm1674, %v1658
          %1678 = vst.msk [vmem:[%s427 + $0x18] sm:$0xff] %vm1674, %v1661
          %1679 = vst.msk [vmem:[%s427 + $0x20] sm:$0xff] %vm1674, %v1664
          %1680 = vst.msk [vmem:[%s427 + $0x28] sm:$0xff] %vm1674, %v1667
          %1681 = vst.msk [vmem:[%s427 + $0x30] sm:$0xff] %vm1674, %v1670
          %1682 = vst.msk [vmem:[%s427 + $0x38] sm:$0xff] %vm1674, %v1673
          %v1683 = vmul.f32 %v1596, %v1596
          %v1684 = vmul.f32 %v1598, %v1598
          %v1685 = vmul.f32 %v1600, %v1600
          %v1686 = vmul.f32 %v1602, %v1602
          %v1687 = vmul.f32 %v1606, %v1606
          %v1688 = vmul.f32 %v1608, %v1608
          %v1689 = vmul.f32 %v1610, %v1610
          %v1690 = vmul.f32 %v1612, %v1612
          %v1691 = vmul.f32 %v1616, %v1616
          %v1692 = vmul.f32 %v1618, %v1618
          %v1693 = vmul.f32 %v1620, %v1620
          %v1694 = vmul.f32 %v1622, %v1622
          %v1695 = vmul.f32 %v1626, %v1626
          %v1696 = vmul.f32 %v1628, %v1628
          %v1697 = vmul.f32 %v1630, %v1630
          %v1698 = vmul.f32 %v1632, %v1632
          %v1699 = vadd.f32 %v1683, %v1684
          %1700 = vadd.xlane.f32.xlu0 %v1699
          %v1701 = vpop.xlane.xlu0 %1700
          %v1702 = vadd.f32 %v1685, %v1686
          %1703 = vadd.xlane.f32.xlu0 %v1702
          %v1704 = vpop.xlane.xlu0 %1703
          %v1705 = vadd.f32 %v1687, %v1688
          %1706 = vadd.xlane.f32.xlu0 %v1705
          %v1707 = vpop.xlane.xlu0 %1706
          %v1708 = vadd.f32 %v1689, %v1690
          %1709 = vadd.xlane.f32.xlu0 %v1708
          %v1710 = vpop.xlane.xlu0 %1709
          %v1711 = vadd.f32 %v1691, %v1692
          %1712 = vadd.xlane.f32.xlu0 %v1711
          %v1713 = vpop.xlane.xlu0 %1712
          %v1714 = vadd.f32 %v1693, %v1694
          %1715 = vadd.xlane.f32.xlu0 %v1714
          %v1716 = vpop.xlane.xlu0 %1715
          %v1717 = vadd.f32 %v1695, %v1696
          %1718 = vadd.xlane.f32.xlu0 %v1717
          %v1719 = vpop.xlane.xlu0 %1718
          %v1720 = vadd.f32 %v1697, %v1698
          %1721 = vadd.xlane.f32.xlu0 %v1720
          %v1722 = vpop.xlane.xlu0 %1721
          %1723 = vst.msk [vmem:[%s432] sm:$0xff] %vm1674, %v1701
          %1724 = vst.msk [vmem:[%s432 + $0x8] sm:$0xff] %vm1674, %v1704
          %1725 = vst.msk [vmem:[%s432 + $0x10] sm:$0xff] %vm1674, %v1707
          %1726 = vst.msk [vmem:[%s432 + $0x18] sm:$0xff] %vm1674, %v1710
          %1727 = vst.msk [vmem:[%s432 + $0x20] sm:$0xff] %vm1674, %v1713
          %1728 = vst.msk [vmem:[%s432 + $0x28] sm:$0xff] %vm1674, %v1716
          %1729 = vst.msk [vmem:[%s432 + $0x30] sm:$0xff] %vm1674, %v1719
          %1730 = vst.msk [vmem:[%s432 + $0x38] sm:$0xff] %vm1674, %v1722
        $region64: #{sa_layer.2} parent=47 // pred_fallthru
          _
        %p1731 = scmp.lt.s32.totalorder %s31, 1
        %s1732 = scalar_select %p1731, %s31, 1
        %s1733 = smul.addr %s1732, 16
        %s1734 = smul.addr %s1733, 8
        %s1735 = scalar_lea.vmem %s7, %s1734
        %p1736 = scmp.lt.s32.totalorder %s31, 1
        %s1737 = scalar_select %p1736, %s31, 1
        %s1738 = smul.addr %s1737, 8
        %s1739 = smul.addr %s1738, 8
        %s1740 = scalar_lea.vmem %s8, %s1739
        %p1741 = scmp.lt.s32.totalorder %s31, 1
        %s1742 = scalar_select %p1741, %s31, 1
        %s1743 = smul.addr %s1742, 8
        %s1744 = smul.addr %s1743, 8
        %s1745 = scalar_lea.vmem %s9, %s1744
        // Predicated region
        $region65: #{sa_layer.2} parent=47 // pred_check
          %p1746 = pneg %p216
        $region66: #{sa_layer.2} parent=47 // pred_check_branch
          %1748 = sbr.rel (%p1746) target = $region68
        $region67: #{sa_layer.2} parent=47 // pred_region
          _
        $region68: #{sa_layer.2} parent=47 // pred_fallthru
          _
        // Predicated region
        $region69: #{sa_layer.2} parent=47 // pred_check
          %p1749 = pneg %p242
        $region70: #{sa_layer.2} parent=47 // pred_check_branch
          %1751 = sbr.rel (%p1749) target = $region72
        $region71: #{sa_layer.2} parent=47 // pred_region
          _
        $region72: #{sa_layer.2} parent=47 // pred_fallthru
          _
        // Predicated region
        $region73: #{sa_layer.2} parent=47 // pred_check
          %p1752 = pneg %p268
        $region74: #{sa_layer.2} parent=47 // pred_check_branch
          %1754 = sbr.rel (%p1752) target = $region76
        $region75: #{sa_layer.2} parent=47 // pred_region
          _
        $region76: #{sa_layer.2} parent=47 // pred_fallthru
          _
      $region48: #{sa_layer.2} parent=5 // pred_fallthru
        _
      %p1755 = scmp.le.s32.totalorder 2, %s22
      // Predicated region
      $region77: #{sa_layer.2} parent=5 // pred_check
        %p1756 = pneg %p1755
      $region78: #{sa_layer.2} parent=5 // pred_check_branch
        %1758 = sbr.rel (%p1756) target = $region80
      $region79: #{sa_layer.2} parent=5 // pred_region
        %s1759 = ssub.s32 %s22, 2
        // Predicated region
        $region81: #{sa_layer.2} parent=79 // pred_check
          %p1760 = pneg %p222
        $region82: #{sa_layer.2} parent=79 // pred_check_branch
          %1762 = sbr.rel (%p1760) target = $region84
        $region83: #{sa_layer.2} parent=79 // pred_region
          %p1763 = scmp.lt.s32.totalorder %s33, 1
          %s1764 = scalar_select %p1763, %s33, 1
          %s1765 = smul.addr %s1764, 16
          %s1766 = smul.addr %s1765, 8
          %s1767 = scalar_lea.vmem %s7, %s1766
        $region84: #{sa_layer.2} parent=79 // pred_fallthru
          _
        // Predicated region
        $region85: #{sa_layer.2} parent=79 // pred_check
          %p1768 = pneg %p248
        $region86: #{sa_layer.2} parent=79 // pred_check_branch
          %1770 = sbr.rel (%p1768) target = $region88
        $region87: #{sa_layer.2} parent=79 // pred_region
          %p1771 = scmp.lt.s32.totalorder %s33, 1
          %s1772 = scalar_select %p1771, %s33, 1
          %s1773 = smul.addr %s1772, 8
          %s1774 = smul.addr %s1773, 8
          %s1775 = scalar_lea.vmem %s8, %s1774
        $region88: #{sa_layer.2} parent=79 // pred_fallthru
          _
        // Predicated region
        $region89: #{sa_layer.2} parent=79 // pred_check
          %p1776 = pneg %p274
        $region90: #{sa_layer.2} parent=79 // pred_check_branch
          %1778 = sbr.rel (%p1776) target = $region92
        $region91: #{sa_layer.2} parent=79 // pred_region
          %p1779 = scmp.lt.s32.totalorder %s33, 1
          %s1780 = scalar_select %p1779, %s33, 1
          %s1781 = smul.addr %s1780, 8
          %s1782 = smul.addr %s1781, 8
          %s1783 = scalar_lea.vmem %s9, %s1782
        $region92: #{sa_layer.2} parent=79 // pred_fallthru
          _
      $region80: #{sa_layer.2} parent=5 // pred_fallthru
        _
    $region6: #{sa_layer.2} parent=1 // loop_footer
      %s26 = sadd.s32 1, %s22
    $region7: #{sa_layer.2} parent=1 // loop_footer_branch
      %21 = sbr.rel target = $region3
    $region8: #{sa_layer.2} parent=1 // loop_exit
      _
    %1784 = vsyncpa [#allocation6], 1
    %s1785 = scalar_lea.sflag [#allocation6], 1
    %1786 = vsyncpa %s1785, 1
    %1787 = vsyncpa [#allocation8], 1
    %s1788 = scalar_lea.sflag [#allocation8], 1
    %1789 = vsyncpa %s1788, 1

</llo_original>
